<compile_context>
chip_gen: v6e
topology: v6e:2x2x1
jax: 0.10.0
libtpu: 0.0.40
codegen_flags: <defaults>
</compile_context>

<pallas_src>
import math
import functools

import jax
import jax.numpy as jnp
from jax.experimental import pallas as pl
from jax.experimental.pallas import tpu as pltpu

EPS = 1e-8


def _gmm_attention_kernel(num_iter, x_ref, mu_ref, log_sigma_ref, pi_ref,
                          noise_ref, out_ref):
    # x_ref:        (BB, N, D)  tokens for this batch block
    # mu_ref:       (K, D)      slots_mu parameter (shared across batch)
    # log_sigma_ref:(K, D)      slots_log_sigma parameter
    # pi_ref:       (1, K)      mixing coefficients
    # noise_ref:    (BB, K, D)  pre-drawn N(0,1) noise (replaces torch.randn)
    # out_ref:      (BB, K, D)  output slots
    BB, N, D = x_ref.shape
    K = mu_ref.shape[0]

    x = x_ref[...].astype(jnp.float32)                        # (BB, N, D)
    x2 = x * x                                                # hoisted out of the EM loop

    # Per-batch EM state (each row evolves independently from shared init).
    mu = jnp.broadcast_to(mu_ref[...].astype(jnp.float32), (BB, K, D))
    sigma = jnp.broadcast_to(
        jnp.exp(log_sigma_ref[...].astype(jnp.float32)), (BB, K, D))
    pi = jnp.broadcast_to(pi_ref[...].astype(jnp.float32), (BB, K))

    inv_n = 1.0 / N

    # num_iter is small (3); a fully-unrolled Python loop is fine.  Switch to
    # lax.fori_loop(..., unroll=True) carrying (mu, sigma, pi) if it grows.
    for _ in range(num_iter):
        # ---- E-step: Gaussian log-likelihood via two MXU matmuls ----
        inv_sigma = 1.0 / (sigma + EPS)                       # (BB,K,D) tiny tile
        w = mu * inv_sigma                                    # (BB,K,D)
        # Per-slot constant, reduced over D *before* any broadcast to N:
        # sum_d[-0.5*log(2*pi*sigma+EPS)] - 0.5*sum_d[mu^2/(sigma+EPS)]
        const = jnp.sum(-0.5 * jnp.log(2.0 * math.pi * sigma + EPS)
                        - 0.5 * mu * w, axis=-1)              # (BB,K)

        logits = jnp.einsum('bnd,bkd->bnk', x, w,
                            preferred_element_type=jnp.float32)
        logits = logits - 0.5 * jnp.einsum('bnd,bkd->bnk', x2, inv_sigma,
                                           preferred_element_type=jnp.float32)
        logits = logits + (const + jnp.log(pi + EPS))[:, None, :]   # (BB,N,K)

        # softmax over slots K
        m = jnp.max(logits, axis=-1, keepdims=True)
        e = jnp.exp(logits - m)
        gamma = e / jnp.sum(e, axis=-1, keepdims=True)        # (BB,N,K)

        # ---- M-step: moments via MXU matmuls ----
        gsum = jnp.sum(gamma, axis=1)                         # (BB,K) single N-reduction
        pi = gsum * inv_n                                     # mean over tokens
        gs = gsum + EPS
        inv_gs = (1.0 / gs)[:, :, None]                       # (BB,K,1)

        s1 = jnp.einsum('bnk,bnd->bkd', gamma, x,
                        preferred_element_type=jnp.float32)   # (BB,K,D)
        s2 = jnp.einsum('bnk,bnd->bkd', gamma, x2,
                        preferred_element_type=jnp.float32)   # (BB,K,D)

        mu = s1 * inv_gs
        # sum_n gamma*(x-mu)^2 / gs  ==  s2/gs - mu^2*(2 - gsum/gs)  (exact algebra)
        sigma = s2 * inv_gs - mu * mu * (2.0 - gsum[:, :, None] * inv_gs)
        # Guard against tiny negative values from f32 cancellation (reference
        # direct form is always >= 0); deviation is below roundoff.
        sigma = jnp.maximum(sigma, 0.0)

    slots = mu + sigma * noise_ref[...].astype(jnp.float32)   # (BB,K,D)
    out_ref[...] = slots.astype(out_ref.dtype)


def gmm_slot_attention(x, slots_mu, slots_log_sigma, mixing_coefficients,
                       noise, num_iter, batch_block=None):
    B, N, D = x.shape
    K = slots_mu.shape[-2]

    if batch_block is None:
        # At most two grid steps: v7x megacore splits the batch across its
        # two TensorCores; single-TC v5e/v6e pay at most one extra ~0.35us
        # pipeline step versus a single fused step.
        batch_block = B // 2 if (B > 1 and B % 2 == 0) else B
    assert B % batch_block == 0, (B, batch_block)
    num_blocks = B // batch_block

    mu2d = slots_mu.reshape(K, D)
    ls2d = slots_log_sigma.reshape(K, D)

    kernel = functools.partial(_gmm_attention_kernel, num_iter)
    return pl.pallas_call(
        kernel,
        out_shape=jax.ShapeDtypeStruct((B, K, D), x.dtype),
        grid_spec=pltpu.PrefetchScalarGridSpec(
            num_scalar_prefetch=0,
            grid=(num_blocks,),
            in_specs=[
                pl.BlockSpec((batch_block, N, D), lambda b: (b, 0, 0)),  # x
                pl.BlockSpec((K, D), lambda b: (0, 0)),                  # slots_mu
                pl.BlockSpec((K, D), lambda b: (0, 0)),                  # slots_log_sigma
                pl.BlockSpec((1, K), lambda b: (0, 0)),                  # mixing coeffs
                pl.BlockSpec((batch_block, K, D), lambda b: (b, 0, 0)),  # noise
            ],
            out_specs=pl.BlockSpec((batch_block, K, D), lambda b: (b, 0, 0)),
        ),
        compiler_params=pltpu.CompilerParams(
            dimension_semantics=("parallel",)),
    )(x, mu2d, ls2d, mixing_coefficients, noise)


def gmm_slot_attention_ref(x, slots_mu, slots_log_sigma, mixing, noise,
                           num_iter):
    """Pure-JAX reference mirroring the PyTorch Attention.forward."""
    B, N, D = x.shape
    K = slots_mu.shape[1]
    mu = jnp.broadcast_to(slots_mu, (B, K, D))
    sigma = jnp.exp(jnp.broadcast_to(slots_log_sigma, (B, K, D)))
    pi = jnp.broadcast_to(mixing, (B, K))
    for _ in range(num_iter):
        diff = x[:, :, None, :] - mu[:, None, :, :]
        exponent = -0.5 * diff ** 2 / (sigma[:, None] + EPS)
        log_coeff = -0.5 * jnp.log(2.0 * math.pi * sigma[:, None] + EPS)
        logits = jnp.sum(log_coeff + exponent, axis=-1)
        logits = logits + jnp.log(pi + EPS)[:, None, :]
        gamma = jax.nn.softmax(logits, axis=-1)
        pi = jnp.mean(gamma, axis=1)
        gs = jnp.sum(gamma, axis=1, keepdims=True) + EPS          # (B,1,K)
        gs_t = jnp.swapaxes(gs, 1, 2)                             # (B,K,1)
        mu = jnp.sum(gamma[..., None] * x[:, :, None, :], axis=1) / gs_t
        diff = x[:, :, None, :] - mu[:, None, :, :]
        sigma = jnp.sum(gamma[..., None] * diff ** 2, axis=1) / gs_t
    return mu + sigma * noise


if __name__ == "__main__":
    B, N, D, K = 2, 36, 32, 4       # 6x6 decoder-sized feature map, hidden_dim=32, 4 slots
    num_iter = 3

    key = jax.random.PRNGKey(0)
    k_x, k_mu, k_ls, k_noise = jax.random.split(key, 4)

    x = jax.random.normal(k_x, (B, N, D), jnp.float32)

    # xavier_uniform_ on a (1, K, D) tensor: fan_in = K*D, fan_out = 1*D
    bound = math.sqrt(6.0 / (K * D + 1 * D))
    slots_mu = jax.random.uniform(k_mu, (1, K, D), jnp.float32, -bound, bound)
    slots_log_sigma = jax.random.uniform(k_ls, (1, K, D), jnp.float32,
                                         -bound, bound)
    mixing = jnp.full((1, K), 1.0 / K, jnp.float32)
    # deterministic replacement for torch.randn(B, K, D) inside forward
    noise = jax.random.normal(k_noise, (B, K, D), jnp.float32)

    slots = gmm_slot_attention(x, slots_mu, slots_log_sigma, mixing, noise,
                               num_iter)
    jax.block_until_ready(slots)

    ref = gmm_slot_attention_ref(x, slots_mu, slots_log_sigma, mixing, noise,
                                 num_iter)
    assert slots.shape == (B, K, D)
    max_err = float(jnp.max(jnp.abs(slots - ref)))
    assert jnp.allclose(slots, ref, rtol=1e-3, atol=1e-3), max_err

    print("KERNEL_OK")
</pallas_src>

<mosaic_0001>
module attributes {stable_mosaic.version = 11 : i64} {
  func.func @_gmm_attention_kernel(%arg0: i32, %arg1: memref<1x36x32xf32, #tpu.memory_space<vmem>>, %arg2: memref<4x32xf32, #tpu.memory_space<vmem>>, %arg3: memref<4x32xf32, #tpu.memory_space<vmem>>, %arg4: memref<1x4xf32, #tpu.memory_space<vmem>>, %arg5: memref<1x4x32xf32, #tpu.memory_space<vmem>>, %arg6: memref<1x4x32xf32, #tpu.memory_space<vmem>>) attributes {dimension_semantics = [#tpu.dimension_semantics<parallel>], iteration_bounds = array<i64: 2>, scalar_prefetch = 0 : i64, scratch_operands = 0 : i64, tpu.core_type = #tpu.core_type<tc>, window_params = [{transform_indices = @transform_0, window_bounds = array<i64: 1, 36, 32>}, {pipeline_mode = #tpu.pipeline_mode<synchronous>, transform_indices = @transform_1, window_bounds = array<i64: 4, 32>}, {pipeline_mode = #tpu.pipeline_mode<synchronous>, transform_indices = @transform_2, window_bounds = array<i64: 4, 32>}, {pipeline_mode = #tpu.pipeline_mode<synchronous>, transform_indices = @transform_3, window_bounds = array<i64: 1, 4>}, {transform_indices = @transform_4, window_bounds = array<i64: 1, 4, 32>}, {transform_indices = @transform_5, window_bounds = array<i64: 1, 4, 32>}]} {
    %c0 = arith.constant 0 : index
    %c0_0 = arith.constant 0 : index
    %c0_1 = arith.constant 0 : index
    %0 = vector.load %arg1[%c0, %c0_0, %c0_1] : memref<1x36x32xf32, #tpu.memory_space<vmem>>, vector<1x36x32xf32>
    %1 = arith.mulf %0, %0 : vector<1x36x32xf32>
    %c0_2 = arith.constant 0 : index
    %c0_3 = arith.constant 0 : index
    %2 = vector.load %arg2[%c0_2, %c0_3] : memref<4x32xf32, #tpu.memory_space<vmem>>, vector<4x32xf32>
    %3 = vector.shape_cast %2 : vector<4x32xf32> to vector<1x4x32xf32>
    %c0_4 = arith.constant 0 : index
    %c0_5 = arith.constant 0 : index
    %4 = vector.load %arg3[%c0_4, %c0_5] : memref<4x32xf32, #tpu.memory_space<vmem>>, vector<4x32xf32>
    %5 = math.exp %4 : vector<4x32xf32>
    %6 = vector.shape_cast %5 : vector<4x32xf32> to vector<1x4x32xf32>
    %c0_6 = arith.constant 0 : index
    %c0_7 = arith.constant 0 : index
    %7 = vector.load %arg4[%c0_6, %c0_7] : memref<1x4xf32, #tpu.memory_space<vmem>>, vector<1x4xf32>
    %cst = arith.constant 9.99999993E-9 : f32
    %8 = vector.broadcast %cst : f32 to vector<1x4x32xf32>
    %9 = arith.addf %6, %8 : vector<1x4x32xf32>
    %cst_8 = arith.constant 1.000000e+00 : f32
    %10 = vector.broadcast %cst_8 : f32 to vector<1x4x32xf32>
    %11 = arith.divf %10, %9 : vector<1x4x32xf32>
    %12 = arith.mulf %3, %11 : vector<1x4x32xf32>
    %cst_9 = arith.constant 6.28318548 : f32
    %13 = vector.broadcast %cst_9 : f32 to vector<1x4x32xf32>
    %14 = arith.mulf %13, %6 : vector<1x4x32xf32>
    %cst_10 = arith.constant 9.99999993E-9 : f32
    %15 = vector.broadcast %cst_10 : f32 to vector<1x4x32xf32>
    %16 = arith.addf %14, %15 : vector<1x4x32xf32>
    %17 = math.log %16 : vector<1x4x32xf32>
    %cst_11 = arith.constant -5.000000e-01 : f32
    %18 = vector.broadcast %cst_11 : f32 to vector<1x4x32xf32>
    %19 = arith.mulf %18, %17 : vector<1x4x32xf32>
    %cst_12 = arith.constant 5.000000e-01 : f32
    %20 = vector.broadcast %cst_12 : f32 to vector<1x4x32xf32>
    %21 = arith.mulf %20, %3 : vector<1x4x32xf32>
    %22 = arith.mulf %21, %12 : vector<1x4x32xf32>
    %23 = arith.subf %19, %22 : vector<1x4x32xf32>
    %cst_13 = arith.constant dense<0.000000e+00> : vector<1x4xf32>
    %24 = vector.multi_reduction <add>, %23, %cst_13 [2] : vector<1x4x32xf32> to vector<1x4xf32>
    "tpu.trace_start"() <{level = 10 : i32, message = "bnd,bkd->bnk"}> : () -> ()
    %cst_14 = arith.constant dense<0.000000e+00> : vector<1x36x4xf32>
    %25 = tpu.matmul %0, %12, %cst_14 {dimension_numbers = #tpu.dot_dimension_numbers<[2], [2], [1], [1], [0, 0, 0, 1, 1, 1], [0], [0]>} : vector<1x36x32xf32>, vector<1x4x32xf32>, vector<1x36x4xf32> -> vector<1x36x4xf32>
    %cst_15 = arith.constant dense<0.000000e+00> : vector<1x36x4xf32>
    %26 = tpu.matmul %1, %11, %cst_15 {dimension_numbers = #tpu.dot_dimension_numbers<[2], [2], [1], [1], [0, 0, 0, 1, 1, 1], [0], [0]>} : vector<1x36x32xf32>, vector<1x4x32xf32>, vector<1x36x4xf32> -> vector<1x36x4xf32>
    "tpu.trace_stop"() : () -> ()
    %cst_16 = arith.constant 5.000000e-01 : f32
    %27 = vector.broadcast %cst_16 : f32 to vector<1x36x4xf32>
    %28 = arith.mulf %27, %26 : vector<1x36x4xf32>
    %29 = arith.subf %25, %28 : vector<1x36x4xf32>
    %cst_17 = arith.constant 9.99999993E-9 : f32
    %30 = vector.broadcast %cst_17 : f32 to vector<1x4xf32>
    %31 = arith.addf %7, %30 : vector<1x4xf32>
    %32 = math.log %31 : vector<1x4xf32>
    %33 = arith.addf %24, %32 : vector<1x4xf32>
    %34 = vector.shape_cast %33 : vector<1x4xf32> to vector<1x1x4xf32>
    %35 = vector.broadcast %34 : vector<1x1x4xf32> to vector<1x36x4xf32>
    %36 = arith.addf %29, %35 : vector<1x36x4xf32>
    %cst_18 = arith.constant dense<0xFF800000> : vector<1x36xf32>
    %37 = vector.multi_reduction <maximumf>, %36, %cst_18 [2] : vector<1x36x4xf32> to vector<1x36xf32>
    %38 = vector.shape_cast %37 : vector<1x36xf32> to vector<1x36x1xf32>
    %39 = vector.broadcast %38 : vector<1x36x1xf32> to vector<1x36x4xf32>
    %40 = arith.subf %36, %39 : vector<1x36x4xf32>
    %41 = math.exp %40 : vector<1x36x4xf32>
    %cst_19 = arith.constant dense<0.000000e+00> : vector<1x36xf32>
    %42 = vector.multi_reduction <add>, %41, %cst_19 [2] : vector<1x36x4xf32> to vector<1x36xf32>
    %43 = vector.shape_cast %42 : vector<1x36xf32> to vector<1x36x1xf32>
    %44 = vector.broadcast %43 : vector<1x36x1xf32> to vector<1x36x4xf32>
    %45 = arith.divf %41, %44 : vector<1x36x4xf32>
    %cst_20 = arith.constant dense<0.000000e+00> : vector<1x4xf32>
    %46 = vector.multi_reduction <add>, %45, %cst_20 [1] : vector<1x36x4xf32> to vector<1x4xf32>
    %cst_21 = arith.constant 0.027777778 : f32
    %47 = vector.broadcast %cst_21 : f32 to vector<1x4xf32>
    %48 = arith.mulf %46, %47 : vector<1x4xf32>
    %cst_22 = arith.constant 9.99999993E-9 : f32
    %49 = vector.broadcast %cst_22 : f32 to vector<1x4xf32>
    %50 = arith.addf %46, %49 : vector<1x4xf32>
    %cst_23 = arith.constant 1.000000e+00 : f32
    %51 = vector.broadcast %cst_23 : f32 to vector<1x4xf32>
    %52 = arith.divf %51, %50 : vector<1x4xf32>
    %53 = vector.shape_cast %52 : vector<1x4xf32> to vector<1x4x1xf32>
    "tpu.trace_start"() <{level = 10 : i32, message = "bnk,bnd->bkd"}> : () -> ()
    %cst_24 = arith.constant dense<0.000000e+00> : vector<1x4x32xf32>
    %54 = tpu.matmul %45, %0, %cst_24 {dimension_numbers = #tpu.dot_dimension_numbers<[1], [1], [2], [2], [0, 0, 0, 2, 1, 2], [0], [0]>} : vector<1x36x4xf32>, vector<1x36x32xf32>, vector<1x4x32xf32> -> vector<1x4x32xf32>
    %cst_25 = arith.constant dense<0.000000e+00> : vector<1x4x32xf32>
    %55 = tpu.matmul %45, %1, %cst_25 {dimension_numbers = #tpu.dot_dimension_numbers<[1], [1], [2], [2], [0, 0, 0, 2, 1, 2], [0], [0]>} : vector<1x36x4xf32>, vector<1x36x32xf32>, vector<1x4x32xf32> -> vector<1x4x32xf32>
    "tpu.trace_stop"() : () -> ()
    %56 = vector.broadcast %53 : vector<1x4x1xf32> to vector<1x4x32xf32>
    %57 = arith.mulf %54, %56 : vector<1x4x32xf32>
    %58 = vector.broadcast %53 : vector<1x4x1xf32> to vector<1x4x32xf32>
    %59 = arith.mulf %55, %58 : vector<1x4x32xf32>
    %60 = arith.mulf %57, %57 : vector<1x4x32xf32>
    %61 = vector.shape_cast %46 : vector<1x4xf32> to vector<1x4x1xf32>
    %62 = arith.mulf %61, %53 : vector<1x4x1xf32>
    %cst_26 = arith.constant 2.000000e+00 : f32
    %63 = vector.broadcast %cst_26 : f32 to vector<1x4x1xf32>
    %64 = arith.subf %63, %62 : vector<1x4x1xf32>
    %65 = vector.broadcast %64 : vector<1x4x1xf32> to vector<1x4x32xf32>
    %66 = arith.mulf %60, %65 : vector<1x4x32xf32>
    %67 = arith.subf %59, %66 : vector<1x4x32xf32>
    %cst_27 = arith.constant 0.000000e+00 : f32
    %68 = vector.broadcast %cst_27 : f32 to vector<1x4x32xf32>
    %69 = arith.maximumf %67, %68 : vector<1x4x32xf32>
    %cst_28 = arith.constant 9.99999993E-9 : f32
    %70 = vector.broadcast %cst_28 : f32 to vector<1x4x32xf32>
    %71 = arith.addf %69, %70 : vector<1x4x32xf32>
    %cst_29 = arith.constant 1.000000e+00 : f32
    %72 = vector.broadcast %cst_29 : f32 to vector<1x4x32xf32>
    %73 = arith.divf %72, %71 : vector<1x4x32xf32>
    %74 = arith.mulf %57, %73 : vector<1x4x32xf32>
    %cst_30 = arith.constant 6.28318548 : f32
    %75 = vector.broadcast %cst_30 : f32 to vector<1x4x32xf32>
    %76 = arith.mulf %75, %69 : vector<1x4x32xf32>
    %cst_31 = arith.constant 9.99999993E-9 : f32
    %77 = vector.broadcast %cst_31 : f32 to vector<1x4x32xf32>
    %78 = arith.addf %76, %77 : vector<1x4x32xf32>
    %79 = math.log %78 : vector<1x4x32xf32>
    %cst_32 = arith.constant -5.000000e-01 : f32
    %80 = vector.broadcast %cst_32 : f32 to vector<1x4x32xf32>
    %81 = arith.mulf %80, %79 : vector<1x4x32xf32>
    %cst_33 = arith.constant 5.000000e-01 : f32
    %82 = vector.broadcast %cst_33 : f32 to vector<1x4x32xf32>
    %83 = arith.mulf %82, %57 : vector<1x4x32xf32>
    %84 = arith.mulf %83, %74 : vector<1x4x32xf32>
    %85 = arith.subf %81, %84 : vector<1x4x32xf32>
    %cst_34 = arith.constant dense<0.000000e+00> : vector<1x4xf32>
    %86 = vector.multi_reduction <add>, %85, %cst_34 [2] : vector<1x4x32xf32> to vector<1x4xf32>
    "tpu.trace_start"() <{level = 10 : i32, message = "bnd,bkd->bnk"}> : () -> ()
    %cst_35 = arith.constant dense<0.000000e+00> : vector<1x36x4xf32>
    %87 = tpu.matmul %0, %74, %cst_35 {dimension_numbers = #tpu.dot_dimension_numbers<[2], [2], [1], [1], [0, 0, 0, 1, 1, 1], [0], [0]>} : vector<1x36x32xf32>, vector<1x4x32xf32>, vector<1x36x4xf32> -> vector<1x36x4xf32>
    %cst_36 = arith.constant dense<0.000000e+00> : vector<1x36x4xf32>
    %88 = tpu.matmul %1, %73, %cst_36 {dimension_numbers = #tpu.dot_dimension_numbers<[2], [2], [1], [1], [0, 0, 0, 1, 1, 1], [0], [0]>} : vector<1x36x32xf32>, vector<1x4x32xf32>, vector<1x36x4xf32> -> vector<1x36x4xf32>
    "tpu.trace_stop"() : () -> ()
    %cst_37 = arith.constant 5.000000e-01 : f32
    %89 = vector.broadcast %cst_37 : f32 to vector<1x36x4xf32>
    %90 = arith.mulf %89, %88 : vector<1x36x4xf32>
    %91 = arith.subf %87, %90 : vector<1x36x4xf32>
    %cst_38 = arith.constant 9.99999993E-9 : f32
    %92 = vector.broadcast %cst_38 : f32 to vector<1x4xf32>
    %93 = arith.addf %48, %92 : vector<1x4xf32>
    %94 = math.log %93 : vector<1x4xf32>
    %95 = arith.addf %86, %94 : vector<1x4xf32>
    %96 = vector.shape_cast %95 : vector<1x4xf32> to vector<1x1x4xf32>
    %97 = vector.broadcast %96 : vector<1x1x4xf32> to vector<1x36x4xf32>
    %98 = arith.addf %91, %97 : vector<1x36x4xf32>
    %cst_39 = arith.constant dense<0xFF800000> : vector<1x36xf32>
    %99 = vector.multi_reduction <maximumf>, %98, %cst_39 [2] : vector<1x36x4xf32> to vector<1x36xf32>
    %100 = vector.shape_cast %99 : vector<1x36xf32> to vector<1x36x1xf32>
    %101 = vector.broadcast %100 : vector<1x36x1xf32> to vector<1x36x4xf32>
    %102 = arith.subf %98, %101 : vector<1x36x4xf32>
    %103 = math.exp %102 : vector<1x36x4xf32>
    %cst_40 = arith.constant dense<0.000000e+00> : vector<1x36xf32>
    %104 = vector.multi_reduction <add>, %103, %cst_40 [2] : vector<1x36x4xf32> to vector<1x36xf32>
    %105 = vector.shape_cast %104 : vector<1x36xf32> to vector<1x36x1xf32>
    %106 = vector.broadcast %105 : vector<1x36x1xf32> to vector<1x36x4xf32>
    %107 = arith.divf %103, %106 : vector<1x36x4xf32>
    %cst_41 = arith.constant dense<0.000000e+00> : vector<1x4xf32>
    %108 = vector.multi_reduction <add>, %107, %cst_41 [1] : vector<1x36x4xf32> to vector<1x4xf32>
    %cst_42 = arith.constant 0.027777778 : f32
    %109 = vector.broadcast %cst_42 : f32 to vector<1x4xf32>
    %110 = arith.mulf %108, %109 : vector<1x4xf32>
    %cst_43 = arith.constant 9.99999993E-9 : f32
    %111 = vector.broadcast %cst_43 : f32 to vector<1x4xf32>
    %112 = arith.addf %108, %111 : vector<1x4xf32>
    %cst_44 = arith.constant 1.000000e+00 : f32
    %113 = vector.broadcast %cst_44 : f32 to vector<1x4xf32>
    %114 = arith.divf %113, %112 : vector<1x4xf32>
    %115 = vector.shape_cast %114 : vector<1x4xf32> to vector<1x4x1xf32>
    "tpu.trace_start"() <{level = 10 : i32, message = "bnk,bnd->bkd"}> : () -> ()
    %cst_45 = arith.constant dense<0.000000e+00> : vector<1x4x32xf32>
    %116 = tpu.matmul %107, %0, %cst_45 {dimension_numbers = #tpu.dot_dimension_numbers<[1], [1], [2], [2], [0, 0, 0, 2, 1, 2], [0], [0]>} : vector<1x36x4xf32>, vector<1x36x32xf32>, vector<1x4x32xf32> -> vector<1x4x32xf32>
    %cst_46 = arith.constant dense<0.000000e+00> : vector<1x4x32xf32>
    %117 = tpu.matmul %107, %1, %cst_46 {dimension_numbers = #tpu.dot_dimension_numbers<[1], [1], [2], [2], [0, 0, 0, 2, 1, 2], [0], [0]>} : vector<1x36x4xf32>, vector<1x36x32xf32>, vector<1x4x32xf32> -> vector<1x4x32xf32>
    "tpu.trace_stop"() : () -> ()
    %118 = vector.broadcast %115 : vector<1x4x1xf32> to vector<1x4x32xf32>
    %119 = arith.mulf %116, %118 : vector<1x4x32xf32>
    %120 = vector.broadcast %115 : vector<1x4x1xf32> to vector<1x4x32xf32>
    %121 = arith.mulf %117, %120 : vector<1x4x32xf32>
    %122 = arith.mulf %119, %119 : vector<1x4x32xf32>
    %123 = vector.shape_cast %108 : vector<1x4xf32> to vector<1x4x1xf32>
    %124 = arith.mulf %123, %115 : vector<1x4x1xf32>
    %cst_47 = arith.constant 2.000000e+00 : f32
    %125 = vector.broadcast %cst_47 : f32 to vector<1x4x1xf32>
    %126 = arith.subf %125, %124 : vector<1x4x1xf32>
    %127 = vector.broadcast %126 : vector<1x4x1xf32> to vector<1x4x32xf32>
    %128 = arith.mulf %122, %127 : vector<1x4x32xf32>
    %129 = arith.subf %121, %128 : vector<1x4x32xf32>
    %cst_48 = arith.constant 0.000000e+00 : f32
    %130 = vector.broadcast %cst_48 : f32 to vector<1x4x32xf32>
    %131 = arith.maximumf %129, %130 : vector<1x4x32xf32>
    %cst_49 = arith.constant 9.99999993E-9 : f32
    %132 = vector.broadcast %cst_49 : f32 to vector<1x4x32xf32>
    %133 = arith.addf %131, %132 : vector<1x4x32xf32>
    %cst_50 = arith.constant 1.000000e+00 : f32
    %134 = vector.broadcast %cst_50 : f32 to vector<1x4x32xf32>
    %135 = arith.divf %134, %133 : vector<1x4x32xf32>
    %136 = arith.mulf %119, %135 : vector<1x4x32xf32>
    %cst_51 = arith.constant 6.28318548 : f32
    %137 = vector.broadcast %cst_51 : f32 to vector<1x4x32xf32>
    %138 = arith.mulf %137, %131 : vector<1x4x32xf32>
    %cst_52 = arith.constant 9.99999993E-9 : f32
    %139 = vector.broadcast %cst_52 : f32 to vector<1x4x32xf32>
    %140 = arith.addf %138, %139 : vector<1x4x32xf32>
    %141 = math.log %140 : vector<1x4x32xf32>
    %cst_53 = arith.constant -5.000000e-01 : f32
    %142 = vector.broadcast %cst_53 : f32 to vector<1x4x32xf32>
    %143 = arith.mulf %142, %141 : vector<1x4x32xf32>
    %cst_54 = arith.constant 5.000000e-01 : f32
    %144 = vector.broadcast %cst_54 : f32 to vector<1x4x32xf32>
    %145 = arith.mulf %144, %119 : vector<1x4x32xf32>
    %146 = arith.mulf %145, %136 : vector<1x4x32xf32>
    %147 = arith.subf %143, %146 : vector<1x4x32xf32>
    %cst_55 = arith.constant dense<0.000000e+00> : vector<1x4xf32>
    %148 = vector.multi_reduction <add>, %147, %cst_55 [2] : vector<1x4x32xf32> to vector<1x4xf32>
    "tpu.trace_start"() <{level = 10 : i32, message = "bnd,bkd->bnk"}> : () -> ()
    %cst_56 = arith.constant dense<0.000000e+00> : vector<1x36x4xf32>
    %149 = tpu.matmul %0, %136, %cst_56 {dimension_numbers = #tpu.dot_dimension_numbers<[2], [2], [1], [1], [0, 0, 0, 1, 1, 1], [0], [0]>} : vector<1x36x32xf32>, vector<1x4x32xf32>, vector<1x36x4xf32> -> vector<1x36x4xf32>
    %cst_57 = arith.constant dense<0.000000e+00> : vector<1x36x4xf32>
    %150 = tpu.matmul %1, %135, %cst_57 {dimension_numbers = #tpu.dot_dimension_numbers<[2], [2], [1], [1], [0, 0, 0, 1, 1, 1], [0], [0]>} : vector<1x36x32xf32>, vector<1x4x32xf32>, vector<1x36x4xf32> -> vector<1x36x4xf32>
    "tpu.trace_stop"() : () -> ()
    %cst_58 = arith.constant 5.000000e-01 : f32
    %151 = vector.broadcast %cst_58 : f32 to vector<1x36x4xf32>
    %152 = arith.mulf %151, %150 : vector<1x36x4xf32>
    %153 = arith.subf %149, %152 : vector<1x36x4xf32>
    %cst_59 = arith.constant 9.99999993E-9 : f32
    %154 = vector.broadcast %cst_59 : f32 to vector<1x4xf32>
    %155 = arith.addf %110, %154 : vector<1x4xf32>
    %156 = math.log %155 : vector<1x4xf32>
    %157 = arith.addf %148, %156 : vector<1x4xf32>
    %158 = vector.shape_cast %157 : vector<1x4xf32> to vector<1x1x4xf32>
    %159 = vector.broadcast %158 : vector<1x1x4xf32> to vector<1x36x4xf32>
    %160 = arith.addf %153, %159 : vector<1x36x4xf32>
    %cst_60 = arith.constant dense<0xFF800000> : vector<1x36xf32>
    %161 = vector.multi_reduction <maximumf>, %160, %cst_60 [2] : vector<1x36x4xf32> to vector<1x36xf32>
    %162 = vector.shape_cast %161 : vector<1x36xf32> to vector<1x36x1xf32>
    %163 = vector.broadcast %162 : vector<1x36x1xf32> to vector<1x36x4xf32>
    %164 = arith.subf %160, %163 : vector<1x36x4xf32>
    %165 = math.exp %164 : vector<1x36x4xf32>
    %cst_61 = arith.constant dense<0.000000e+00> : vector<1x36xf32>
    %166 = vector.multi_reduction <add>, %165, %cst_61 [2] : vector<1x36x4xf32> to vector<1x36xf32>
    %167 = vector.shape_cast %166 : vector<1x36xf32> to vector<1x36x1xf32>
    %168 = vector.broadcast %167 : vector<1x36x1xf32> to vector<1x36x4xf32>
    %169 = arith.divf %165, %168 : vector<1x36x4xf32>
    %cst_62 = arith.constant dense<0.000000e+00> : vector<1x4xf32>
    %170 = vector.multi_reduction <add>, %169, %cst_62 [1] : vector<1x36x4xf32> to vector<1x4xf32>
    %cst_63 = arith.constant 9.99999993E-9 : f32
    %171 = vector.broadcast %cst_63 : f32 to vector<1x4xf32>
    %172 = arith.addf %170, %171 : vector<1x4xf32>
    %cst_64 = arith.constant 1.000000e+00 : f32
    %173 = vector.broadcast %cst_64 : f32 to vector<1x4xf32>
    %174 = arith.divf %173, %172 : vector<1x4xf32>
    %175 = vector.shape_cast %174 : vector<1x4xf32> to vector<1x4x1xf32>
    "tpu.trace_start"() <{level = 10 : i32, message = "bnk,bnd->bkd"}> : () -> ()
    %cst_65 = arith.constant dense<0.000000e+00> : vector<1x4x32xf32>
    %176 = tpu.matmul %169, %0, %cst_65 {dimension_numbers = #tpu.dot_dimension_numbers<[1], [1], [2], [2], [0, 0, 0, 2, 1, 2], [0], [0]>} : vector<1x36x4xf32>, vector<1x36x32xf32>, vector<1x4x32xf32> -> vector<1x4x32xf32>
    %cst_66 = arith.constant dense<0.000000e+00> : vector<1x4x32xf32>
    %177 = tpu.matmul %169, %1, %cst_66 {dimension_numbers = #tpu.dot_dimension_numbers<[1], [1], [2], [2], [0, 0, 0, 2, 1, 2], [0], [0]>} : vector<1x36x4xf32>, vector<1x36x32xf32>, vector<1x4x32xf32> -> vector<1x4x32xf32>
    "tpu.trace_stop"() : () -> ()
    %178 = vector.broadcast %175 : vector<1x4x1xf32> to vector<1x4x32xf32>
    %179 = arith.mulf %176, %178 : vector<1x4x32xf32>
    %180 = vector.broadcast %175 : vector<1x4x1xf32> to vector<1x4x32xf32>
    %181 = arith.mulf %177, %180 : vector<1x4x32xf32>
    %182 = arith.mulf %179, %179 : vector<1x4x32xf32>
    %183 = vector.shape_cast %170 : vector<1x4xf32> to vector<1x4x1xf32>
    %184 = arith.mulf %183, %175 : vector<1x4x1xf32>
    %cst_67 = arith.constant 2.000000e+00 : f32
    %185 = vector.broadcast %cst_67 : f32 to vector<1x4x1xf32>
    %186 = arith.subf %185, %184 : vector<1x4x1xf32>
    %187 = vector.broadcast %186 : vector<1x4x1xf32> to vector<1x4x32xf32>
    %188 = arith.mulf %182, %187 : vector<1x4x32xf32>
    %189 = arith.subf %181, %188 : vector<1x4x32xf32>
    %cst_68 = arith.constant 0.000000e+00 : f32
    %190 = vector.broadcast %cst_68 : f32 to vector<1x4x32xf32>
    %191 = arith.maximumf %189, %190 : vector<1x4x32xf32>
    %c0_69 = arith.constant 0 : index
    %c0_70 = arith.constant 0 : index
    %c0_71 = arith.constant 0 : index
    %192 = vector.load %arg5[%c0_69, %c0_70, %c0_71] : memref<1x4x32xf32, #tpu.memory_space<vmem>>, vector<1x4x32xf32>
    %193 = arith.mulf %191, %192 : vector<1x4x32xf32>
    %194 = arith.addf %179, %193 : vector<1x4x32xf32>
    %c0_72 = arith.constant 0 : index
    %c0_73 = arith.constant 0 : index
    %c0_74 = arith.constant 0 : index
    %195 = vector.load %arg6[%c0_72, %c0_73, %c0_74] : memref<1x4x32xf32, #tpu.memory_space<vmem>>, vector<1x4x32xf32>
    tpu.vector_store %arg6[%c0_72, %c0_73, %c0_74], %194 {strides = array<i32>} : memref<1x4x32xf32, #tpu.memory_space<vmem>>, vector<1x4x32xf32>,
    return
  }
  func.func @transform_0(%arg0: i32) -> (i32, i32, i32) {
    %c0_i32 = arith.constant 0 : i32
    %c0_i32_0 = arith.constant 0 : i32
    %c0_i32_1 = arith.constant 0 : i32
    return %arg0, %c0_i32, %c0_i32_0 : i32, i32, i32
  }
  func.func @transform_1(%arg0: i32) -> (i32, i32) {
    %c0_i32 = arith.constant 0 : i32
    %c0_i32_0 = arith.constant 0 : i32
    %c0_i32_1 = arith.constant 0 : i32
    return %c0_i32, %c0_i32_0 : i32, i32
  }
  func.func @transform_2(%arg0: i32) -> (i32, i32) {
    %c0_i32 = arith.constant 0 : i32
    %c0_i32_0 = arith.constant 0 : i32
    %c0_i32_1 = arith.constant 0 : i32
    return %c0_i32, %c0_i32_0 : i32, i32
  }
  func.func @transform_3(%arg0: i32) -> (i32, i32) {
    %c0_i32 = arith.constant 0 : i32
    %c0_i32_0 = arith.constant 0 : i32
    %c0_i32_1 = arith.constant 0 : i32
    return %c0_i32, %c0_i32_0 : i32, i32
  }
  func.func @transform_4(%arg0: i32) -> (i32, i32, i32) {
    %c0_i32 = arith.constant 0 : i32
    %c0_i32_0 = arith.constant 0 : i32
    %c0_i32_1 = arith.constant 0 : i32
    return %arg0, %c0_i32, %c0_i32_0 : i32, i32, i32
  }
  func.func @transform_5(%arg0: i32) -> (i32, i32, i32) {
    %c0_i32 = arith.constant 0 : i32
    %c0_i32_0 = arith.constant 0 : i32
    %c0_i32_1 = arith.constant 0 : i32
    return %arg0, %c0_i32, %c0_i32_0 : i32, i32, i32
  }
}

</mosaic_0001>

<llo_original>
// kernel: tpu_custom_call.1
$region0: #{tpu_custom_call.1}
  #allocation0 [shape = 'u32[]', space=smem, size = 0x4, offset = 0x4, fixed_abs, tag = 'smem constant byte address 0x4 - core index']
  #allocation1 [shape = 'u32[144,128]{1,0:T(1,128)}', space=vmem, size = 0x12000, scoped, tag = 'internal scratch']
  %s0 = inlined_call_operand.vmem [shape: f32[2,36,32], index: 0, kind: input, shape index: {}]
  %s1 = inlined_call_operand.vmem [shape: f32[4,32], index: 1, kind: input, shape index: {}]
  %s2 = inlined_call_operand.vmem [shape: f32[4,32], index: 2, kind: input, shape index: {}]
  %s3 = inlined_call_operand.vmem [shape: f32[1,4], index: 3, kind: input, shape index: {}]
  %s4 = inlined_call_operand.vmem [shape: f32[2,4,32], index: 4, kind: input, shape index: {}]
  %s5 = inlined_call_operand.hbm [shape: f32[2,4,32], index: 5, kind: output, shape index: {}]
  %s6 = sld [smem:[#allocation0]]
  $region53: #{tpu_custom_call.1} parent=0
    _
  %s8 = ssub.s32 1, %s6
  %s9 = scalar_select 0, %s8, %s6
  $region1: #{tpu_custom_call.1} parent=0
    #allocation2 [shape = 'u8[4096]{0}', space=vmem, size = 0x1000, scoped, tag = 'output window, operand 0']
    #allocation3 [shape = 's32[2]{0}', space=sflag, size = 0x8, scoped, tag = 'scoped memory for tpu_custom_call.1']
    %10 = vsyncpa [#allocation3], 0
    %s11 = scalar_lea.sflag [#allocation3], 1
    %12 = vsyncpa %s11, 0
    loop: start=0, step=1, limit=4
    $region2: #{tpu_custom_call.1} parent=1 // loop_pre_header
      _
    $region3: #{tpu_custom_call.1} parent=1 // loop_header
      %s14 = sphi 0, %s18
      %p15 = scmp.ge.s32.totalorder %s14, 4
      %s24 = sphi 0, %s26
      %s27 = sphi 0, %s24
      %s28 = sphi 0, %s27
      %s44 = sphi 0, %s28
      %s48 = sphi 0, %s48
      %s50 = sphi 0, %s48
      %s51 = sphi 0, %s50
      %s65 = sphi 0, %s51
      %s69 = sphi 0, %s69
      %s71 = sphi 0, %s69
      %s72 = sphi 0, %s71
      %s86 = sphi 0, %s72
      %s90 = sphi 0, %s90
      %s92 = sphi 0, %s90
      %s93 = sphi 0, %s92
      %s107 = sphi 0, %s93
      %s113 = sphi 0, %s115
      %s116 = sphi 0, %s113
      %s117 = sphi 0, %s116
      %s133 = sphi 0, %s117
      %s139 = sphi 0, %s141
      %s142 = sphi 0, %s139
      %s143 = sphi 0, %s142
      %s159 = sphi 0, %s143
    $region4: #{tpu_custom_call.1} parent=1 // loop_header_branch
      %17 = sbr.rel (%p15) target = $region8
    $region5: #{tpu_custom_call.1} parent=1 // loop_body
      %s19 = ssub.s32 %s14, 1
      %s20 = ssub.s32 %s14, 2
      %s21 = sadd.s32 %s14, 1
      %s22 = ssub.s32 %s14, %s21
      %p23 = scmp.eq.s32.totalorder %s22, 0
      %s25 = sadd.s32 %s24, 1
      %s26 = scalar_select %p23, %s24, %s25
      %p29 = pneg %p23
      %p30 = scmp.eq.s32.totalorder %s14, 1
      %p31 = por %p29, %p30
      %p32 = scmp.ne.s32.totalorder %s24, %s27
      %p33 = scmp.eq.s32.totalorder %s14, 0
      %p34 = por %p32, %p33
      %p35 = scmp.ne.s32.totalorder %s24, %s27
      %p36 = scmp.eq.s32.totalorder %s19, 1
      %p37 = por %p35, %p36
      %p38 = scmp.ne.s32.totalorder %s27, %s28
      %p39 = scmp.eq.s32.totalorder %s19, 0
      %p40 = por %p38, %p39
      %p41 = scmp.ne.s32.totalorder %s27, %s28
      %p42 = scmp.eq.s32.totalorder %s20, 1
      %p43 = por %p41, %p42
      %p45 = scmp.ne.s32.totalorder %s28, %s44
      %p46 = scmp.eq.s32.totalorder %s20, 0
      %p47 = por %p45, %p46
      %s49 = sadd.s32 %s48, 1
      %p52 = scmp.eq.s32.totalorder %s14, 1
      %p53 = scmp.ne.s32.totalorder %s48, %s50
      %p54 = scmp.eq.s32.totalorder %s14, 0
      %p55 = por %p53, %p54
      %p56 = scmp.ne.s32.totalorder %s48, %s50
      %p57 = scmp.eq.s32.totalorder %s19, 1
      %p58 = por %p56, %p57
      %p59 = scmp.ne.s32.totalorder %s50, %s51
      %p60 = scmp.eq.s32.totalorder %s19, 0
      %p61 = por %p59, %p60
      %p62 = scmp.ne.s32.totalorder %s50, %s51
      %p63 = scmp.eq.s32.totalorder %s20, 1
      %p64 = por %p62, %p63
      %p66 = scmp.ne.s32.totalorder %s51, %s65
      %p67 = scmp.eq.s32.totalorder %s20, 0
      %p68 = por %p66, %p67
      %s70 = sadd.s32 %s69, 1
      %p73 = scmp.eq.s32.totalorder %s14, 1
      %p74 = scmp.ne.s32.totalorder %s69, %s71
      %p75 = scmp.eq.s32.totalorder %s14, 0
      %p76 = por %p74, %p75
      %p77 = scmp.ne.s32.totalorder %s69, %s71
      %p78 = scmp.eq.s32.totalorder %s19, 1
      %p79 = por %p77, %p78
      %p80 = scmp.ne.s32.totalorder %s71, %s72
      %p81 = scmp.eq.s32.totalorder %s19, 0
      %p82 = por %p80, %p81
      %p83 = scmp.ne.s32.totalorder %s71, %s72
      %p84 = scmp.eq.s32.totalorder %s20, 1
      %p85 = por %p83, %p84
      %p87 = scmp.ne.s32.totalorder %s72, %s86
      %p88 = scmp.eq.s32.totalorder %s20, 0
      %p89 = por %p87, %p88
      %s91 = sadd.s32 %s90, 1
      %p94 = scmp.eq.s32.totalorder %s14, 1
      %p95 = scmp.ne.s32.totalorder %s90, %s92
      %p96 = scmp.eq.s32.totalorder %s14, 0
      %p97 = por %p95, %p96
      %p98 = scmp.ne.s32.totalorder %s90, %s92
      %p99 = scmp.eq.s32.totalorder %s19, 1
      %p100 = por %p98, %p99
      %p101 = scmp.ne.s32.totalorder %s92, %s93
      %p102 = scmp.eq.s32.totalorder %s19, 0
      %p103 = por %p101, %p102
      %p104 = scmp.ne.s32.totalorder %s92, %s93
      %p105 = scmp.eq.s32.totalorder %s20, 1
      %p106 = por %p104, %p105
      %p108 = scmp.ne.s32.totalorder %s93, %s107
      %p109 = scmp.eq.s32.totalorder %s20, 0
      %p110 = por %p108, %p109
      %s111 = ssub.s32 %s14, %s21
      %p112 = scmp.eq.s32.totalorder %s111, 0
      %s114 = sadd.s32 %s113, 1
      %s115 = scalar_select %p112, %s113, %s114
      %p118 = pneg %p112
      %p119 = scmp.eq.s32.totalorder %s14, 1
      %p120 = por %p118, %p119
      %p121 = scmp.ne.s32.totalorder %s113, %s116
      %p122 = scmp.eq.s32.totalorder %s14, 0
      %p123 = por %p121, %p122
      %p124 = scmp.ne.s32.totalorder %s113, %s116
      %p125 = scmp.eq.s32.totalorder %s19, 1
      %p126 = por %p124, %p125
      %p127 = scmp.ne.s32.totalorder %s116, %s117
      %p128 = scmp.eq.s32.totalorder %s19, 0
      %p129 = por %p127, %p128
      %p130 = scmp.ne.s32.totalorder %s116, %s117
      %p131 = scmp.eq.s32.totalorder %s20, 1
      %p132 = por %p130, %p131
      %p134 = scmp.ne.s32.totalorder %s117, %s133
      %p135 = scmp.eq.s32.totalorder %s20, 0
      %p136 = por %p134, %p135
      %s137 = ssub.s32 %s14, %s21
      %p138 = scmp.eq.s32.totalorder %s137, 0
      %s140 = sadd.s32 %s139, 1
      %s141 = scalar_select %p138, %s139, %s140
      %p144 = pneg %p138
      %p145 = scmp.eq.s32.totalorder %s14, 1
      %p146 = por %p144, %p145
      %p147 = scmp.ne.s32.totalorder %s139, %s142
      %p148 = scmp.eq.s32.totalorder %s14, 0
      %p149 = por %p147, %p148
      %p150 = scmp.ne.s32.totalorder %s139, %s142
      %p151 = scmp.eq.s32.totalorder %s19, 1
      %p152 = por %p150, %p151
      %p153 = scmp.ne.s32.totalorder %s142, %s143
      %p154 = scmp.eq.s32.totalorder %s19, 0
      %p155 = por %p153, %p154
      %p156 = scmp.ne.s32.totalorder %s142, %s143
      %p157 = scmp.eq.s32.totalorder %s20, 1
      %p158 = por %p156, %p157
      %p160 = scmp.ne.s32.totalorder %s143, %s159
      %p161 = scmp.eq.s32.totalorder %s20, 0
      %p162 = por %p160, %p161
      %p163 = scmp.le.s32.totalorder 1, %s14
      %p164 = scmp.lt.s32.totalorder %s14, 3
      %p165 = pnand %p163, %p164
      %p166 = pneg %p165
      // Predicated region
      $region9: #{tpu_custom_call.1} parent=5 // pred_check
        _
      $region10: #{tpu_custom_call.1} parent=5 // pred_check_branch
        %168 = sbr.rel (%p165) target = $region12
      $region11: #{tpu_custom_call.1} parent=5 // pred_region
        %s169 = ssub.s32 %s14, 1
        // Predicated region
        $region13: #{tpu_custom_call.1} parent=11 // pred_check
          %p170 = pneg %p61
        $region14: #{tpu_custom_call.1} parent=11 // pred_check_branch
          %172 = sbr.rel (%p170) target = $region16
        $region15: #{tpu_custom_call.1} parent=11 // pred_region
          _
        $region16: #{tpu_custom_call.1} parent=11 // pred_fallthru
          _
        // Predicated region
        $region17: #{tpu_custom_call.1} parent=11 // pred_check
          %p173 = pneg %p82
        $region18: #{tpu_custom_call.1} parent=11 // pred_check_branch
          %175 = sbr.rel (%p173) target = $region20
        $region19: #{tpu_custom_call.1} parent=11 // pred_region
          _
        $region20: #{tpu_custom_call.1} parent=11 // pred_fallthru
          _
        // Predicated region
        $region21: #{tpu_custom_call.1} parent=11 // pred_check
          %p176 = pneg %p103
        $region22: #{tpu_custom_call.1} parent=11 // pred_check_branch
          %178 = sbr.rel (%p176) target = $region24
        $region23: #{tpu_custom_call.1} parent=11 // pred_region
          _
        $region24: #{tpu_custom_call.1} parent=11 // pred_fallthru
          _
      $region12: #{tpu_custom_call.1} parent=5 // pred_fallthru
        _
      %p179 = scmp.lt.s32.totalorder %s14, 2
      // Predicated region
      $region25: #{tpu_custom_call.1} parent=5 // pred_check
        %p180 = pneg %p179
      $region26: #{tpu_custom_call.1} parent=5 // pred_check_branch
        %182 = sbr.rel (%p180) target = $region28
      $region27: #{tpu_custom_call.1} parent=5 // pred_region
        // Predicated region
        $region29: #{tpu_custom_call.1} parent=27 // pred_check
          %p183 = pneg %p34
        $region30: #{tpu_custom_call.1} parent=27 // pred_check_branch
          %185 = sbr.rel (%p183) target = $region32
        $region31: #{tpu_custom_call.1} parent=27 // pred_region
          %p186 = scmp.lt.s32.totalorder %s14, 1
          %s187 = scalar_select %p186, %s14, 1
          %s188 = smul.addr %s187, 5
          %s189 = smul.addr %s188, 8
          %s190 = scalar_lea.vmem %s0, %s189
        $region32: #{tpu_custom_call.1} parent=27 // pred_fallthru
          _
        // Predicated region
        $region33: #{tpu_custom_call.1} parent=27 // pred_check
          %p191 = pneg %p123
        $region34: #{tpu_custom_call.1} parent=27 // pred_check_branch
          %193 = sbr.rel (%p191) target = $region36
        $region35: #{tpu_custom_call.1} parent=27 // pred_region
          %p194 = scmp.lt.s32.totalorder %s14, 1
          %s195 = scalar_select %p194, %s14, 1
          %s196 = smul.addr %s195, 4
          %s197 = scalar_lea.vmem %s4, %s196
        $region36: #{tpu_custom_call.1} parent=27 // pred_fallthru
          _
      $region28: #{tpu_custom_call.1} parent=5 // pred_fallthru
        _
      %p198 = scmp.le.s32.totalorder 1, %s14
      %p199 = scmp.lt.s32.totalorder %s14, 3
      %p200 = pnand %p198, %p199
      %p201 = pneg %p200
      // Predicated region
      $region37: #{tpu_custom_call.1} parent=5 // pred_check
        _
      $region38: #{tpu_custom_call.1} parent=5 // pred_check_branch
        %203 = sbr.rel (%p200) target = $region40
      $region39: #{tpu_custom_call.1} parent=5 // pred_region
        %s204 = ssub.s32 %s14, 1
        %p205 = scmp.lt.s32.totalorder %s19, 1
        %s206 = scalar_select %p205, %s19, 1
        %s207 = smul.addr %s206, 5
        %s208 = smul.addr %s207, 8
        %s209 = scalar_lea.vmem %s0, %s208
        %p210 = pneg %p40
        %p211 = pneg %p37
        %p212 = pneg %p61
        %p213 = pneg %p58
        %p214 = pneg %p82
        %p215 = pneg %p79
        %p216 = pneg %p103
        %p217 = pneg %p100
        %p218 = scmp.lt.s32.totalorder %s19, 1
        %s219 = scalar_select %p218, %s19, 1
        %s220 = smul.addr %s219, 4
        %s221 = scalar_lea.vmem %s4, %s220
        %p222 = pneg %p129
        %p223 = pneg %p126
        %p224 = pneg %p155
        %p225 = pneg %p152
        %s226 = sand.u32 %s142, 1
        %s227 = scalar_lea.sflag [#allocation3], %s226
        %s228 = sand.u32 %s142, 1
        %s229 = smul.addr %s228, 4
        %s230 = scalar_lea.vmem [#allocation2], %s229
        %p231 = scmp.lt.s32.totalorder %s19, 1
        %s232 = scalar_select %p231, %s19, 1
        %s233 = smul.addr %s232, 5
        %s234 = smul.addr %s233, 8
        %s235 = scalar_lea.vmem %s0, %s234
        %p236 = scmp.lt.s32.totalorder %s19, 1
        %s237 = scalar_select %p236, %s19, 1
        %s238 = smul.addr %s237, 4
        %s239 = scalar_lea.vmem %s4, %s238
        %v240 = vld [vmem:[%s235] sm:$0xff]
        %v241 = vld [vmem:[%s235 + $0x8] sm:$0xff]
        %v242 = vld [vmem:[%s235 + $0x10] sm:$0xff]
        %v243 = vld [vmem:[%s235 + $0x18] sm:$0xff]
        %v244 = vld [vmem:[%s235 + $0x20] sm:$0xf]
        %v245 = vmul.f32 %v240, %v240
        %v246 = vmul.f32 %v241, %v241
        %v247 = vmul.f32 %v242, %v242
        %v248 = vmul.f32 %v243, %v243
        %v249 = vmul.f32 %v244, %v244
        %v250 = vld [vmem:[%s1] sm:$0xf]
        %v251 = vld [vmem:[%s2] sm:$0xf]
        %v252 = vmul.f32 %v251, 1.442695
        %v253 = vpow.pop %v252
        %v254 = vld [vmem:[%s3] sm:$0x1]
        %v255 = vadd.f32 %v253, 1e-08
        %v256 = vrcp.pop %v255
        %v257 = vmul.f32 1.0, %v256
        %v258 = vmul.f32 %v250, %v257
        %v259 = vmul.f32 %v253, 6.2831855
        %v260 = vadd.f32 %v259, 1e-08
        %v261 = vlog2.pop %v260
        %v262 = vmul.f32 %v261, 0.6931472
        %v263 = vmul.f32 %v262, -0.5
        %v264 = vmul.f32 %v250, 0.5
        %v265 = vmul.f32 %v264, %v258
        %v266 = vsub.f32 %v263, %v265
        %vm267 = vcmask 257024
        %v268 = vsel %vm267, %v266, 0.0
        %269 = vadd.xlane.f32.xlu0 %v268
        %v270 = vpop.xlane.xlu0 %269
        %vm271 = vcmask 261120
        %v273 = vsel %vm271, %v240, 0
        %v276 = vsel %vm271, %v241, 0
        %v279 = vsel %vm271, %v242, 0
        %v282 = vsel %vm271, %v243, 0
        %v285 = vsel %vm271, %v244, 0
        %v288 = vsel %vm271, %v258, 0
        %290 = vmatprep.subr.mxu0 0.0
        %291 = vmatpush1.xpose.msra.mxu0 0.0
        %292 = vmatprep.subr.mxu0 0.0
        %293 = vmatpush1.xpose.msra.mxu0 0.0
        %294 = vmatprep.subr.mxu0 0.0
        %295 = vmatpush1.xpose.msra.mxu0 0.0
        %296 = vmatprep.subr.mxu0 0.0
        %297 = vmatpush1.xpose.msra.mxu0 0.0
        %298 = vmatprep.subr.mxu0 0.0
        %299 = vmatpush1.xpose.msra.mxu0 0.0
        %300 = vmatprep.subr.mxu0 0.0
        %301 = vmatpush1.xpose.msra.mxu0 0.0
        %302 = vmatprep.subr.mxu0 0.0
        %303 = vmatpush1.xpose.msra.mxu0 0.0
        %304 = vmatprep.subr.mxu0 0.0
        %305 = vmatpush1.xpose.msra.mxu0 0.0
        %306 = vmatprep.subr.mxu0 0.0
        %307 = vmatpush1.xpose.msra.mxu0 0.0
        %308 = vmatprep.subr.mxu0 0.0
        %309 = vmatpush1.xpose.msra.mxu0 0.0
        %310 = vmatprep.subr.mxu0 0.0
        %311 = vmatpush1.xpose.msra.mxu0 0.0
        %312 = vmatprep.subr.mxu0 0.0
        %313 = vmatpush1.xpose.msra.mxu0 0.0
        %314 = vmatprep.subr.mxu0 0.0
        %315 = vmatpush1.xpose.msra.mxu0 0.0
        %316 = vmatprep.subr.mxu0 0.0
        %317 = vmatpush1.xpose.msra.mxu0 0.0
        %318 = vmatprep.subr.mxu0 0.0
        %319 = vmatpush1.xpose.msra.mxu0 0.0
        %320 = vmatprep.subr.mxu0 0.0
        %321 = vmatpush1.xpose.msra.mxu0 %v288
        %322 = vmatprep.subr.mxu0 0.0
        %323 = vmatpush2.xpose.msra.mxu0 0.0
        %324 = vmatprep.subr.mxu0 0.0
        %325 = vmatpush2.xpose.msra.mxu0 0.0
        %326 = vmatprep.subr.mxu0 0.0
        %327 = vmatpush2.xpose.msra.mxu0 0.0
        %328 = vmatprep.subr.mxu0 0.0
        %329 = vmatpush2.xpose.msra.mxu0 0.0
        %330 = vmatprep.subr.mxu0 0.0
        %331 = vmatpush2.xpose.msra.mxu0 0.0
        %332 = vmatprep.subr.mxu0 0.0
        %333 = vmatpush2.xpose.msra.mxu0 0.0
        %334 = vmatprep.subr.mxu0 0.0
        %335 = vmatpush2.xpose.msra.mxu0 0.0
        %336 = vmatprep.subr.mxu0 0.0
        %337 = vmatpush2.xpose.msra.mxu0 0.0
        %338 = vmatprep.subr.mxu0 0.0
        %339 = vmatpush2.xpose.msra.mxu0 0.0
        %340 = vmatprep.subr.mxu0 0.0
        %341 = vmatpush2.xpose.msra.mxu0 0.0
        %342 = vmatprep.subr.mxu0 0.0
        %343 = vmatpush2.xpose.msra.mxu0 0.0
        %344 = vmatprep.subr.mxu0 0.0
        %345 = vmatpush2.xpose.msra.mxu0 0.0
        %346 = vmatprep.subr.mxu0 0.0
        %347 = vmatpush2.xpose.msra.mxu0 0.0
        %348 = vmatprep.subr.mxu0 0.0
        %349 = vmatpush2.xpose.msra.mxu0 0.0
        %350 = vmatprep.subr.mxu0 0.0
        %351 = vmatpush2.xpose.msra.mxu0 0.0
        %352 = vmatprep.subr.mxu0 0.0
        %353 = vmatpush2.xpose.msra.mxu0 0.0
        %354 = vmatprep.mubr.f32.mxu0 0.0
        %355 = vmatmul.mubr.f32.gmra.mxu0 %v273
        %v356 = vpop.f32.mrf.mxu0
        %v357 = vadd.f32 0.0, %v356
        %v358 = vpop.f32.mrf.mxu0
        %359 = vmatprep.mubr.f32.mxu0 0.0
        %360 = vmatmul.mubr.f32.gmra.mxu0 %v276
        %v361 = vpop.f32.mrf.mxu0
        %v362 = vadd.f32 0.0, %v361
        %v363 = vpop.f32.mrf.mxu0
        %364 = vmatprep.mubr.f32.mxu0 0.0
        %365 = vmatmul.mubr.f32.gmra.mxu0 %v279
        %v366 = vpop.f32.mrf.mxu0
        %v367 = vadd.f32 0.0, %v366
        %v368 = vpop.f32.mrf.mxu0
        %369 = vmatprep.mubr.f32.mxu0 0.0
        %370 = vmatmul.mubr.f32.gmra.mxu0 %v282
        %v371 = vpop.f32.mrf.mxu0
        %v372 = vadd.f32 0.0, %v371
        %v373 = vpop.f32.mrf.mxu0
        %374 = vmatprep.mubr.f32.mxu0 0.0
        %375 = vmatmul.mubr.f32.gmra.mxu0 %v285
        %v376 = vpop.f32.mrf.mxu0
        %v377 = vadd.f32 0.0, %v376
        %v378 = vpop.f32.mrf.mxu0
        %379 = vdwg.mxu0
        %v381 = vsel %vm271, %v245, 0
        %v384 = vsel %vm271, %v246, 0
        %v387 = vsel %vm271, %v247, 0
        %v390 = vsel %vm271, %v248, 0
        %v393 = vsel %vm271, %v249, 0
        %v396 = vsel %vm271, %v257, 0
        %398 = vmatprep.subr.mxu0 0.0
        %399 = vmatpush1.xpose.msra.mxu0 0.0
        %400 = vmatprep.subr.mxu0 0.0
        %401 = vmatpush1.xpose.msra.mxu0 0.0
        %402 = vmatprep.subr.mxu0 0.0
        %403 = vmatpush1.xpose.msra.mxu0 0.0
        %404 = vmatprep.subr.mxu0 0.0
        %405 = vmatpush1.xpose.msra.mxu0 0.0
        %406 = vmatprep.subr.mxu0 0.0
        %407 = vmatpush1.xpose.msra.mxu0 0.0
        %408 = vmatprep.subr.mxu0 0.0
        %409 = vmatpush1.xpose.msra.mxu0 0.0
        %410 = vmatprep.subr.mxu0 0.0
        %411 = vmatpush1.xpose.msra.mxu0 0.0
        %412 = vmatprep.subr.mxu0 0.0
        %413 = vmatpush1.xpose.msra.mxu0 0.0
        %414 = vmatprep.subr.mxu0 0.0
        %415 = vmatpush1.xpose.msra.mxu0 0.0
        %416 = vmatprep.subr.mxu0 0.0
        %417 = vmatpush1.xpose.msra.mxu0 0.0
        %418 = vmatprep.subr.mxu0 0.0
        %419 = vmatpush1.xpose.msra.mxu0 0.0
        %420 = vmatprep.subr.mxu0 0.0
        %421 = vmatpush1.xpose.msra.mxu0 0.0
        %422 = vmatprep.subr.mxu0 0.0
        %423 = vmatpush1.xpose.msra.mxu0 0.0
        %424 = vmatprep.subr.mxu0 0.0
        %425 = vmatpush1.xpose.msra.mxu0 0.0
        %426 = vmatprep.subr.mxu0 0.0
        %427 = vmatpush1.xpose.msra.mxu0 0.0
        %428 = vmatprep.subr.mxu0 0.0
        %429 = vmatpush1.xpose.msra.mxu0 %v396
        %430 = vmatprep.subr.mxu0 0.0
        %431 = vmatpush2.xpose.msra.mxu0 0.0
        %432 = vmatprep.subr.mxu0 0.0
        %433 = vmatpush2.xpose.msra.mxu0 0.0
        %434 = vmatprep.subr.mxu0 0.0
        %435 = vmatpush2.xpose.msra.mxu0 0.0
        %436 = vmatprep.subr.mxu0 0.0
        %437 = vmatpush2.xpose.msra.mxu0 0.0
        %438 = vmatprep.subr.mxu0 0.0
        %439 = vmatpush2.xpose.msra.mxu0 0.0
        %440 = vmatprep.subr.mxu0 0.0
        %441 = vmatpush2.xpose.msra.mxu0 0.0
        %442 = vmatprep.subr.mxu0 0.0
        %443 = vmatpush2.xpose.msra.mxu0 0.0
        %444 = vmatprep.subr.mxu0 0.0
        %445 = vmatpush2.xpose.msra.mxu0 0.0
        %446 = vmatprep.subr.mxu0 0.0
        %447 = vmatpush2.xpose.msra.mxu0 0.0
        %448 = vmatprep.subr.mxu0 0.0
        %449 = vmatpush2.xpose.msra.mxu0 0.0
        %450 = vmatprep.subr.mxu0 0.0
        %451 = vmatpush2.xpose.msra.mxu0 0.0
        %452 = vmatprep.subr.mxu0 0.0
        %453 = vmatpush2.xpose.msra.mxu0 0.0
        %454 = vmatprep.subr.mxu0 0.0
        %455 = vmatpush2.xpose.msra.mxu0 0.0
        %456 = vmatprep.subr.mxu0 0.0
        %457 = vmatpush2.xpose.msra.mxu0 0.0
        %458 = vmatprep.subr.mxu0 0.0
        %459 = vmatpush2.xpose.msra.mxu0 0.0
        %460 = vmatprep.subr.mxu0 0.0
        %461 = vmatpush2.xpose.msra.mxu0 0.0
        %462 = vmatprep.mubr.f32.mxu0 0.0
        %463 = vmatmul.mubr.f32.gmra.mxu0 %v381
        %v464 = vpop.f32.mrf.mxu0
        %v465 = vadd.f32 0.0, %v464
        %v466 = vpop.f32.mrf.mxu0
        %467 = vmatprep.mubr.f32.mxu0 0.0
        %468 = vmatmul.mubr.f32.gmra.mxu0 %v384
        %v469 = vpop.f32.mrf.mxu0
        %v470 = vadd.f32 0.0, %v469
        %v471 = vpop.f32.mrf.mxu0
        %472 = vmatprep.mubr.f32.mxu0 0.0
        %473 = vmatmul.mubr.f32.gmra.mxu0 %v387
        %v474 = vpop.f32.mrf.mxu0
        %v475 = vadd.f32 0.0, %v474
        %v476 = vpop.f32.mrf.mxu0
        %477 = vmatprep.mubr.f32.mxu0 0.0
        %478 = vmatmul.mubr.f32.gmra.mxu0 %v390
        %v479 = vpop.f32.mrf.mxu0
        %v480 = vadd.f32 0.0, %v479
        %v481 = vpop.f32.mrf.mxu0
        %482 = vmatprep.mubr.f32.mxu0 0.0
        %483 = vmatmul.mubr.f32.gmra.mxu0 %v393
        %v484 = vpop.f32.mrf.mxu0
        %v485 = vadd.f32 0.0, %v484
        %v486 = vpop.f32.mrf.mxu0
        %487 = vdwg.mxu0
        %v488 = vmul.f32 %v465, 0.5
        %v489 = vmul.f32 %v470, 0.5
        %v490 = vmul.f32 %v475, 0.5
        %v491 = vmul.f32 %v480, 0.5
        %v492 = vmul.f32 %v485, 0.5
        %v493 = vsub.f32 %v357, %v488
        %v494 = vsub.f32 %v362, %v489
        %v495 = vsub.f32 %v367, %v490
        %v496 = vsub.f32 %v372, %v491
        %v497 = vsub.f32 %v377, %v492
        %v498 = vadd.f32 %v254, 1e-08
        %v499 = vlog2.pop %v498
        %v500 = vmul.f32 %v499, 0.6931472
        %v502 = vlaneseq
        %v503 = vshrl.u32 %v502, 7
        %v504 = vsub.s32 0, %v503
        %v505 = vrot.slane %v500, %v504
        %507 = vbcast.lane.b32.xlu0 %v505, 256
        %v508 = vpop.permute.xlu0 %507
        %v510 = vadd.f32 %v270, %v508
        %512 = vset.pattern.permute.xlu0 0
        %513 = vperm.xlu0 %512, %v510
        %v514 = vpop.permute.xlu0 %513
        %v515 = vlaneseq
        %v516 = vand.u32 %v515, 127
        %v517 = vlaneseq
        %v518 = vshrl.u32 %v517, 7
        %v519 = vsub.s32 %v516, %v518
        %v520 = vrot.slane %v514, %v519
        %vm521 = vcmask 1042434
        %v522 = vsel %vm521, %v520, %v520
        %vm523 = vcmask 1043459
        %v524 = vsel %vm523, %v520, %v522
        %vm525 = vcmask 1044484
        %v526 = vsel %vm525, %v520, %v524
        %vm527 = vcmask 1045509
        %v528 = vsel %vm527, %v520, %v526
        %vm529 = vcmask 1046534
        %v530 = vsel %vm529, %v520, %v528
        %vm531 = vcmask 1047559
        %v532 = vsel %vm531, %v520, %v530
        %v535 = vadd.f32 %v493, %v532
        %v536 = vadd.f32 %v494, %v532
        %v537 = vadd.f32 %v495, %v532
        %v538 = vadd.f32 %v496, %v532
        %v539 = vadd.f32 %v497, %v524
        %vm540 = vcmask 31744
        %v541 = vsel %vm540, %v535, -inf
        %542 = vmax.xlane.f32.xlu0 %v541
        %v543 = vpop.xlane.xlu0 %542
        %v544 = vsel %vm540, %v536, -inf
        %545 = vmax.xlane.f32.xlu0 %v544
        %v546 = vpop.xlane.xlu0 %545
        %v547 = vsel %vm540, %v537, -inf
        %548 = vmax.xlane.f32.xlu0 %v547
        %v549 = vpop.xlane.xlu0 %548
        %v550 = vsel %vm540, %v538, -inf
        %551 = vmax.xlane.f32.xlu0 %v550
        %v552 = vpop.xlane.xlu0 %551
        %vm553 = vcmask 27648
        %v554 = vsel %vm553, %v539, -inf
        %555 = vmax.xlane.f32.xlu0 %v554
        %v556 = vpop.xlane.xlu0 %555
        %v557 = vsub.f32 %v535, %v543
        %v558 = vsub.f32 %v536, %v546
        %v559 = vsub.f32 %v537, %v549
        %v560 = vsub.f32 %v538, %v552
        %v561 = vsub.f32 %v539, %v556
        %v562 = vmul.f32 %v557, 1.442695
        %v563 = vpow.pop %v562
        %v564 = vmul.f32 %v558, 1.442695
        %v565 = vpow.pop %v564
        %v566 = vmul.f32 %v559, 1.442695
        %v567 = vpow.pop %v566
        %v568 = vmul.f32 %v560, 1.442695
        %v569 = vpow.pop %v568
        %v570 = vmul.f32 %v561, 1.442695
        %v571 = vpow.pop %v570
        %v572 = vsel %vm540, %v563, 0.0
        %573 = vadd.xlane.f32.xlu0 %v572
        %v574 = vpop.xlane.xlu0 %573
        %v575 = vsel %vm540, %v565, 0.0
        %576 = vadd.xlane.f32.xlu0 %v575
        %v577 = vpop.xlane.xlu0 %576
        %v578 = vsel %vm540, %v567, 0.0
        %579 = vadd.xlane.f32.xlu0 %v578
        %v580 = vpop.xlane.xlu0 %579
        %v581 = vsel %vm540, %v569, 0.0
        %582 = vadd.xlane.f32.xlu0 %v581
        %v583 = vpop.xlane.xlu0 %582
        %v584 = vsel %vm553, %v571, 0.0
        %585 = vadd.xlane.f32.xlu0 %v584
        %v586 = vpop.xlane.xlu0 %585
        %v587 = vrcp.pop %v574
        %v588 = vmul.f32 %v563, %v587
        %v589 = vrcp.pop %v577
        %v590 = vmul.f32 %v565, %v589
        %v591 = vrcp.pop %v580
        %v592 = vmul.f32 %v567, %v591
        %v593 = vrcp.pop %v583
        %v594 = vmul.f32 %v569, %v593
        %v595 = vrcp.pop %v586
        %v596 = vmul.f32 %v571, %v595
        %v597 = vsel %vm540, %v588, 0.0
        %v598 = vsel %vm540, %v590, 0.0
        %v599 = vadd.f32 %v597, %v598
        %v600 = vsel %vm540, %v592, 0.0
        %v601 = vadd.f32 %v599, %v600
        %v602 = vsel %vm540, %v594, 0.0
        %v603 = vadd.f32 %v601, %v602
        %v604 = vsel %vm553, %v596, 0.0
        %v605 = vadd.f32 %v603, %v604
        %v606 = vrot.slane %v605, 4
        %v607 = vadd.f32 %v605, %v606
        %v608 = vrot.slane %v607, 2
        %v609 = vadd.f32 %v607, %v608
        %v610 = vrot.slane %v609, 1
        %v611 = vadd.f32 %v609, %v610
        %v612 = vmul.f32 %v611, 0.027777778
        %v613 = vadd.f32 %v611, 1e-08
        %v614 = vrcp.pop %v613
        %v615 = vmul.f32 1.0, %v614
        %617 = vbcast.lane.b32.xlu0 %v615, 256
        %v618 = vpop.permute.xlu0 %617
        %619 = vxpose.xlu0.b32.start [1/16] %v588, 128
        %620 = vxpose.xlu0.b32.cont [2/16] %v590, 128
        %621 = vxpose.xlu0.b32.cont [3/16] %v592, 128
        %622 = vxpose.xlu0.b32.cont [4/16] %v594, 128
        %623 = vxpose.xlu0.b32.cont [5/16] %v596, 128
        %624 = vxpose.xlu0.b32.cont [6/16] 0.0, 128
        %625 = vxpose.xlu0.b32.cont [7/16] 0.0, 128
        %626 = vxpose.xlu0.b32.cont [8/16] 0.0, 128
        %627 = vxpose.xlu0.b32.cont [9/16] 0.0, 128
        %628 = vxpose.xlu0.b32.cont [10/16] 0.0, 128
        %629 = vxpose.xlu0.b32.cont [11/16] 0.0, 128
        %630 = vxpose.xlu0.b32.cont [12/16] 0.0, 128
        %631 = vxpose.xlu0.b32.cont [13/16] 0.0, 128
        %632 = vxpose.xlu0.b32.cont [14/16] 0.0, 128
        %633 = vxpose.xlu0.b32.cont [15/16] 0.0, 128
        %634 = vxpose.xlu0.b32.end [16/16] 0.0, 128
        %v635 = vpop.trf.xlu0
        %v636 = vpop.trf.xlu0
        %v637 = vpop.trf.xlu0
        %v638 = vpop.trf.xlu0
        %v639 = vpop.trf.xlu0
        %v640 = vpop.trf.xlu0
        %v641 = vpop.trf.xlu0
        %v642 = vpop.trf.xlu0
        %v643 = vpop.trf.xlu0
        %v644 = vpop.trf.xlu0
        %v645 = vpop.trf.xlu0
        %v646 = vpop.trf.xlu0
        %v647 = vpop.trf.xlu0
        %v648 = vpop.trf.xlu0
        %v649 = vpop.trf.xlu0
        %v650 = vpop.trf.xlu0
        %vm651 = vcmask 293888
        %v653 = vsel %vm651, %v635, 0
        %vm655 = vcmask 1043456
        %v656 = vsel %vm655, %v244, 0
        %658 = vmatprep.subr.mxu0 0.0
        %659 = vmatpush1.msra.mxu0 0.0
        %660 = vmatprep.subr.mxu0 0.0
        %661 = vmatpush1.msra.mxu0 0.0
        %662 = vmatprep.subr.mxu0 0.0
        %663 = vmatpush1.msra.mxu0 0.0
        %664 = vmatprep.subr.mxu0 0.0
        %665 = vmatpush1.msra.mxu0 0.0
        %666 = vmatprep.subr.mxu0 0.0
        %667 = vmatpush1.msra.mxu0 0.0
        %668 = vmatprep.subr.mxu0 0.0
        %669 = vmatpush1.msra.mxu0 0.0
        %670 = vmatprep.subr.mxu0 0.0
        %671 = vmatpush1.msra.mxu0 0.0
        %672 = vmatprep.subr.mxu0 0.0
        %673 = vmatpush1.msra.mxu0 0.0
        %674 = vmatprep.subr.mxu0 0.0
        %675 = vmatpush1.msra.mxu0 0.0
        %676 = vmatprep.subr.mxu0 0.0
        %677 = vmatpush1.msra.mxu0 0.0
        %678 = vmatprep.subr.mxu0 0.0
        %679 = vmatpush1.msra.mxu0 0.0
        %680 = vmatprep.subr.mxu0 0.0
        %681 = vmatpush1.msra.mxu0 %v656
        %682 = vmatprep.subr.mxu0 0.0
        %683 = vmatpush1.msra.mxu0 %v243
        %684 = vmatprep.subr.mxu0 0.0
        %685 = vmatpush1.msra.mxu0 %v242
        %686 = vmatprep.subr.mxu0 0.0
        %687 = vmatpush1.msra.mxu0 %v241
        %688 = vmatprep.subr.mxu0 0.0
        %689 = vmatpush1.msra.mxu0 %v240
        %690 = vmatprep.subr.mxu0 0.0
        %691 = vmatpush2.msra.mxu0 0.0
        %692 = vmatprep.subr.mxu0 0.0
        %693 = vmatpush2.msra.mxu0 0.0
        %694 = vmatprep.subr.mxu0 0.0
        %695 = vmatpush2.msra.mxu0 0.0
        %696 = vmatprep.subr.mxu0 0.0
        %697 = vmatpush2.msra.mxu0 0.0
        %698 = vmatprep.subr.mxu0 0.0
        %699 = vmatpush2.msra.mxu0 0.0
        %700 = vmatprep.subr.mxu0 0.0
        %701 = vmatpush2.msra.mxu0 0.0
        %702 = vmatprep.subr.mxu0 0.0
        %703 = vmatpush2.msra.mxu0 0.0
        %704 = vmatprep.subr.mxu0 0.0
        %705 = vmatpush2.msra.mxu0 0.0
        %706 = vmatprep.subr.mxu0 0.0
        %707 = vmatpush2.msra.mxu0 0.0
        %708 = vmatprep.subr.mxu0 0.0
        %709 = vmatpush2.msra.mxu0 0.0
        %710 = vmatprep.subr.mxu0 0.0
        %711 = vmatpush2.msra.mxu0 0.0
        %712 = vmatprep.subr.mxu0 0.0
        %713 = vmatpush2.msra.mxu0 0.0
        %714 = vmatprep.subr.mxu0 0.0
        %715 = vmatpush2.msra.mxu0 0.0
        %716 = vmatprep.subr.mxu0 0.0
        %717 = vmatpush2.msra.mxu0 0.0
        %718 = vmatprep.subr.mxu0 0.0
        %719 = vmatpush2.msra.mxu0 0.0
        %720 = vmatprep.subr.mxu0 0.0
        %721 = vmatpush2.msra.mxu0 0.0
        %722 = vmatprep.mubr.f32.mxu0 0.0
        %723 = vmatmul.mubr.f32.gmra.mxu0 %v653
        %v724 = vpop.f32.mrf.mxu0
        %v725 = vadd.f32 0.0, %v724
        %v726 = vpop.f32.mrf.mxu0
        %727 = vdwg.mxu0
        %v728 = vsel %vm655, %v249, 0
        %730 = vmatprep.subr.mxu0 0.0
        %731 = vmatpush1.msra.mxu0 0.0
        %732 = vmatprep.subr.mxu0 0.0
        %733 = vmatpush1.msra.mxu0 0.0
        %734 = vmatprep.subr.mxu0 0.0
        %735 = vmatpush1.msra.mxu0 0.0
        %736 = vmatprep.subr.mxu0 0.0
        %737 = vmatpush1.msra.mxu0 0.0
        %738 = vmatprep.subr.mxu0 0.0
        %739 = vmatpush1.msra.mxu0 0.0
        %740 = vmatprep.subr.mxu0 0.0
        %741 = vmatpush1.msra.mxu0 0.0
        %742 = vmatprep.subr.mxu0 0.0
        %743 = vmatpush1.msra.mxu0 0.0
        %744 = vmatprep.subr.mxu0 0.0
        %745 = vmatpush1.msra.mxu0 0.0
        %746 = vmatprep.subr.mxu0 0.0
        %747 = vmatpush1.msra.mxu0 0.0
        %748 = vmatprep.subr.mxu0 0.0
        %749 = vmatpush1.msra.mxu0 0.0
        %750 = vmatprep.subr.mxu0 0.0
        %751 = vmatpush1.msra.mxu0 0.0
        %752 = vmatprep.subr.mxu0 0.0
        %753 = vmatpush1.msra.mxu0 %v728
        %754 = vmatprep.subr.mxu0 0.0
        %755 = vmatpush1.msra.mxu0 %v248
        %756 = vmatprep.subr.mxu0 0.0
        %757 = vmatpush1.msra.mxu0 %v247
        %758 = vmatprep.subr.mxu0 0.0
        %759 = vmatpush1.msra.mxu0 %v246
        %760 = vmatprep.subr.mxu0 0.0
        %761 = vmatpush1.msra.mxu0 %v245
        %762 = vmatprep.subr.mxu0 0.0
        %763 = vmatpush2.msra.mxu0 0.0
        %764 = vmatprep.subr.mxu0 0.0
        %765 = vmatpush2.msra.mxu0 0.0
        %766 = vmatprep.subr.mxu0 0.0
        %767 = vmatpush2.msra.mxu0 0.0
        %768 = vmatprep.subr.mxu0 0.0
        %769 = vmatpush2.msra.mxu0 0.0
        %770 = vmatprep.subr.mxu0 0.0
        %771 = vmatpush2.msra.mxu0 0.0
        %772 = vmatprep.subr.mxu0 0.0
        %773 = vmatpush2.msra.mxu0 0.0
        %774 = vmatprep.subr.mxu0 0.0
        %775 = vmatpush2.msra.mxu0 0.0
        %776 = vmatprep.subr.mxu0 0.0
        %777 = vmatpush2.msra.mxu0 0.0
        %778 = vmatprep.subr.mxu0 0.0
        %779 = vmatpush2.msra.mxu0 0.0
        %780 = vmatprep.subr.mxu0 0.0
        %781 = vmatpush2.msra.mxu0 0.0
        %782 = vmatprep.subr.mxu0 0.0
        %783 = vmatpush2.msra.mxu0 0.0
        %784 = vmatprep.subr.mxu0 0.0
        %785 = vmatpush2.msra.mxu0 0.0
        %786 = vmatprep.subr.mxu0 0.0
        %787 = vmatpush2.msra.mxu0 0.0
        %788 = vmatprep.subr.mxu0 0.0
        %789 = vmatpush2.msra.mxu0 0.0
        %790 = vmatprep.subr.mxu0 0.0
        %791 = vmatpush2.msra.mxu0 0.0
        %792 = vmatprep.subr.mxu0 0.0
        %793 = vmatpush2.msra.mxu0 0.0
        %794 = vmatprep.mubr.f32.mxu0 0.0
        %795 = vmatmul.mubr.f32.gmra.mxu0 %v653
        %v796 = vpop.f32.mrf.mxu0
        %v797 = vadd.f32 0.0, %v796
        %v798 = vpop.f32.mrf.mxu0
        %799 = vdwg.mxu0
        %v800 = vmul.f32 %v725, %v618
        %v801 = vmul.f32 %v797, %v618
        %v802 = vmul.f32 %v800, %v800
        %804 = vbcast.lane.b32.xlu0 %v611, 256
        %v805 = vpop.permute.xlu0 %804
        %v806 = vmul.f32 %v805, %v618
        %v807 = vsub.f32 2.0, %v806
        %v808 = vmul.f32 %v802, %v807
        %v809 = vsub.f32 %v801, %v808
        %v810 = vmax.f32 %v809, 0.0
        %v811 = vadd.f32 %v810, 1e-08
        %v812 = vrcp.pop %v811
        %v813 = vmul.f32 1.0, %v812
        %v814 = vmul.f32 %v800, %v813
        %v815 = vmul.f32 %v810, 6.2831855
        %v816 = vadd.f32 %v815, 1e-08
        %v817 = vlog2.pop %v816
        %v818 = vmul.f32 %v817, 0.6931472
        %v819 = vmul.f32 %v818, -0.5
        %v820 = vmul.f32 %v800, 0.5
        %v821 = vmul.f32 %v820, %v814
        %v822 = vsub.f32 %v819, %v821
        %v823 = vsel %vm267, %v822, 0.0
        %824 = vadd.xlane.f32.xlu0 %v823
        %v825 = vpop.xlane.xlu0 %824
        %v827 = vsel %vm271, %v814, 0
        %829 = vmatprep.subr.mxu0 0.0
        %830 = vmatpush1.xpose.msra.mxu0 0.0
        %831 = vmatprep.subr.mxu0 0.0
        %832 = vmatpush1.xpose.msra.mxu0 0.0
        %833 = vmatprep.subr.mxu0 0.0
        %834 = vmatpush1.xpose.msra.mxu0 0.0
        %835 = vmatprep.subr.mxu0 0.0
        %836 = vmatpush1.xpose.msra.mxu0 0.0
        %837 = vmatprep.subr.mxu0 0.0
        %838 = vmatpush1.xpose.msra.mxu0 0.0
        %839 = vmatprep.subr.mxu0 0.0
        %840 = vmatpush1.xpose.msra.mxu0 0.0
        %841 = vmatprep.subr.mxu0 0.0
        %842 = vmatpush1.xpose.msra.mxu0 0.0
        %843 = vmatprep.subr.mxu0 0.0
        %844 = vmatpush1.xpose.msra.mxu0 0.0
        %845 = vmatprep.subr.mxu0 0.0
        %846 = vmatpush1.xpose.msra.mxu0 0.0
        %847 = vmatprep.subr.mxu0 0.0
        %848 = vmatpush1.xpose.msra.mxu0 0.0
        %849 = vmatprep.subr.mxu0 0.0
        %850 = vmatpush1.xpose.msra.mxu0 0.0
        %851 = vmatprep.subr.mxu0 0.0
        %852 = vmatpush1.xpose.msra.mxu0 0.0
        %853 = vmatprep.subr.mxu0 0.0
        %854 = vmatpush1.xpose.msra.mxu0 0.0
        %855 = vmatprep.subr.mxu0 0.0
        %856 = vmatpush1.xpose.msra.mxu0 0.0
        %857 = vmatprep.subr.mxu0 0.0
        %858 = vmatpush1.xpose.msra.mxu0 0.0
        %859 = vmatprep.subr.mxu0 0.0
        %860 = vmatpush1.xpose.msra.mxu0 %v827
        %861 = vmatprep.subr.mxu0 0.0
        %862 = vmatpush2.xpose.msra.mxu0 0.0
        %863 = vmatprep.subr.mxu0 0.0
        %864 = vmatpush2.xpose.msra.mxu0 0.0
        %865 = vmatprep.subr.mxu0 0.0
        %866 = vmatpush2.xpose.msra.mxu0 0.0
        %867 = vmatprep.subr.mxu0 0.0
        %868 = vmatpush2.xpose.msra.mxu0 0.0
        %869 = vmatprep.subr.mxu0 0.0
        %870 = vmatpush2.xpose.msra.mxu0 0.0
        %871 = vmatprep.subr.mxu0 0.0
        %872 = vmatpush2.xpose.msra.mxu0 0.0
        %873 = vmatprep.subr.mxu0 0.0
        %874 = vmatpush2.xpose.msra.mxu0 0.0
        %875 = vmatprep.subr.mxu0 0.0
        %876 = vmatpush2.xpose.msra.mxu0 0.0
        %877 = vmatprep.subr.mxu0 0.0
        %878 = vmatpush2.xpose.msra.mxu0 0.0
        %879 = vmatprep.subr.mxu0 0.0
        %880 = vmatpush2.xpose.msra.mxu0 0.0
        %881 = vmatprep.subr.mxu0 0.0
        %882 = vmatpush2.xpose.msra.mxu0 0.0
        %883 = vmatprep.subr.mxu0 0.0
        %884 = vmatpush2.xpose.msra.mxu0 0.0
        %885 = vmatprep.subr.mxu0 0.0
        %886 = vmatpush2.xpose.msra.mxu0 0.0
        %887 = vmatprep.subr.mxu0 0.0
        %888 = vmatpush2.xpose.msra.mxu0 0.0
        %889 = vmatprep.subr.mxu0 0.0
        %890 = vmatpush2.xpose.msra.mxu0 0.0
        %891 = vmatprep.subr.mxu0 0.0
        %892 = vmatpush2.xpose.msra.mxu0 0.0
        %893 = vmatprep.mubr.f32.mxu0 0.0
        %894 = vmatmul.mubr.f32.gmra.mxu0 %v273
        %v895 = vpop.f32.mrf.mxu0
        %v896 = vadd.f32 0.0, %v895
        %v897 = vpop.f32.mrf.mxu0
        %898 = vmatprep.mubr.f32.mxu0 0.0
        %899 = vmatmul.mubr.f32.gmra.mxu0 %v276
        %v900 = vpop.f32.mrf.mxu0
        %v901 = vadd.f32 0.0, %v900
        %v902 = vpop.f32.mrf.mxu0
        %903 = vmatprep.mubr.f32.mxu0 0.0
        %904 = vmatmul.mubr.f32.gmra.mxu0 %v279
        %v905 = vpop.f32.mrf.mxu0
        %v906 = vadd.f32 0.0, %v905
        %v907 = vpop.f32.mrf.mxu0
        %908 = vmatprep.mubr.f32.mxu0 0.0
        %909 = vmatmul.mubr.f32.gmra.mxu0 %v282
        %v910 = vpop.f32.mrf.mxu0
        %v911 = vadd.f32 0.0, %v910
        %v912 = vpop.f32.mrf.mxu0
        %913 = vmatprep.mubr.f32.mxu0 0.0
        %914 = vmatmul.mubr.f32.gmra.mxu0 %v285
        %v915 = vpop.f32.mrf.mxu0
        %v916 = vadd.f32 0.0, %v915
        %v917 = vpop.f32.mrf.mxu0
        %918 = vdwg.mxu0
        %v920 = vsel %vm271, %v813, 0
        %922 = vmatprep.subr.mxu0 0.0
        %923 = vmatpush1.xpose.msra.mxu0 0.0
        %924 = vmatprep.subr.mxu0 0.0
        %925 = vmatpush1.xpose.msra.mxu0 0.0
        %926 = vmatprep.subr.mxu0 0.0
        %927 = vmatpush1.xpose.msra.mxu0 0.0
        %928 = vmatprep.subr.mxu0 0.0
        %929 = vmatpush1.xpose.msra.mxu0 0.0
        %930 = vmatprep.subr.mxu0 0.0
        %931 = vmatpush1.xpose.msra.mxu0 0.0
        %932 = vmatprep.subr.mxu0 0.0
        %933 = vmatpush1.xpose.msra.mxu0 0.0
        %934 = vmatprep.subr.mxu0 0.0
        %935 = vmatpush1.xpose.msra.mxu0 0.0
        %936 = vmatprep.subr.mxu0 0.0
        %937 = vmatpush1.xpose.msra.mxu0 0.0
        %938 = vmatprep.subr.mxu0 0.0
        %939 = vmatpush1.xpose.msra.mxu0 0.0
        %940 = vmatprep.subr.mxu0 0.0
        %941 = vmatpush1.xpose.msra.mxu0 0.0
        %942 = vmatprep.subr.mxu0 0.0
        %943 = vmatpush1.xpose.msra.mxu0 0.0
        %944 = vmatprep.subr.mxu0 0.0
        %945 = vmatpush1.xpose.msra.mxu0 0.0
        %946 = vmatprep.subr.mxu0 0.0
        %947 = vmatpush1.xpose.msra.mxu0 0.0
        %948 = vmatprep.subr.mxu0 0.0
        %949 = vmatpush1.xpose.msra.mxu0 0.0
        %950 = vmatprep.subr.mxu0 0.0
        %951 = vmatpush1.xpose.msra.mxu0 0.0
        %952 = vmatprep.subr.mxu0 0.0
        %953 = vmatpush1.xpose.msra.mxu0 %v920
        %954 = vmatprep.subr.mxu0 0.0
        %955 = vmatpush2.xpose.msra.mxu0 0.0
        %956 = vmatprep.subr.mxu0 0.0
        %957 = vmatpush2.xpose.msra.mxu0 0.0
        %958 = vmatprep.subr.mxu0 0.0
        %959 = vmatpush2.xpose.msra.mxu0 0.0
        %960 = vmatprep.subr.mxu0 0.0
        %961 = vmatpush2.xpose.msra.mxu0 0.0
        %962 = vmatprep.subr.mxu0 0.0
        %963 = vmatpush2.xpose.msra.mxu0 0.0
        %964 = vmatprep.subr.mxu0 0.0
        %965 = vmatpush2.xpose.msra.mxu0 0.0
        %966 = vmatprep.subr.mxu0 0.0
        %967 = vmatpush2.xpose.msra.mxu0 0.0
        %968 = vmatprep.subr.mxu0 0.0
        %969 = vmatpush2.xpose.msra.mxu0 0.0
        %970 = vmatprep.subr.mxu0 0.0
        %971 = vmatpush2.xpose.msra.mxu0 0.0
        %972 = vmatprep.subr.mxu0 0.0
        %973 = vmatpush2.xpose.msra.mxu0 0.0
        %974 = vmatprep.subr.mxu0 0.0
        %975 = vmatpush2.xpose.msra.mxu0 0.0
        %976 = vmatprep.subr.mxu0 0.0
        %977 = vmatpush2.xpose.msra.mxu0 0.0
        %978 = vmatprep.subr.mxu0 0.0
        %979 = vmatpush2.xpose.msra.mxu0 0.0
        %980 = vmatprep.subr.mxu0 0.0
        %981 = vmatpush2.xpose.msra.mxu0 0.0
        %982 = vmatprep.subr.mxu0 0.0
        %983 = vmatpush2.xpose.msra.mxu0 0.0
        %984 = vmatprep.subr.mxu0 0.0
        %985 = vmatpush2.xpose.msra.mxu0 0.0
        %986 = vmatprep.mubr.f32.mxu0 0.0
        %987 = vmatmul.mubr.f32.gmra.mxu0 %v381
        %v988 = vpop.f32.mrf.mxu0
        %v989 = vadd.f32 0.0, %v988
        %v990 = vpop.f32.mrf.mxu0
        %991 = vmatprep.mubr.f32.mxu0 0.0
        %992 = vmatmul.mubr.f32.gmra.mxu0 %v384
        %v993 = vpop.f32.mrf.mxu0
        %v994 = vadd.f32 0.0, %v993
        %v995 = vpop.f32.mrf.mxu0
        %996 = vmatprep.mubr.f32.mxu0 0.0
        %997 = vmatmul.mubr.f32.gmra.mxu0 %v387
        %v998 = vpop.f32.mrf.mxu0
        %v999 = vadd.f32 0.0, %v998
        %v1000 = vpop.f32.mrf.mxu0
        %1001 = vmatprep.mubr.f32.mxu0 0.0
        %1002 = vmatmul.mubr.f32.gmra.mxu0 %v390
        %v1003 = vpop.f32.mrf.mxu0
        %v1004 = vadd.f32 0.0, %v1003
        %v1005 = vpop.f32.mrf.mxu0
        %1006 = vmatprep.mubr.f32.mxu0 0.0
        %1007 = vmatmul.mubr.f32.gmra.mxu0 %v393
        %v1008 = vpop.f32.mrf.mxu0
        %v1009 = vadd.f32 0.0, %v1008
        %v1010 = vpop.f32.mrf.mxu0
        %1011 = vdwg.mxu0
        %v1012 = vmul.f32 %v989, 0.5
        %v1013 = vmul.f32 %v994, 0.5
        %v1014 = vmul.f32 %v999, 0.5
        %v1015 = vmul.f32 %v1004, 0.5
        %v1016 = vmul.f32 %v1009, 0.5
        %v1017 = vsub.f32 %v896, %v1012
        %v1018 = vsub.f32 %v901, %v1013
        %v1019 = vsub.f32 %v906, %v1014
        %v1020 = vsub.f32 %v911, %v1015
        %v1021 = vsub.f32 %v916, %v1016
        %v1022 = vadd.f32 %v612, 1e-08
        %v1023 = vlog2.pop %v1022
        %v1024 = vmul.f32 %v1023, 0.6931472
        %1027 = vbcast.lane.b32.xlu0 %v1024, 256
        %v1028 = vpop.permute.xlu0 %1027
        %v1030 = vadd.f32 %v825, %v1028
        %1032 = vset.pattern.permute.xlu0 0
        %1033 = vperm.xlu0 %1032, %v1030
        %v1034 = vpop.permute.xlu0 %1033
        %v1035 = vlaneseq
        %v1036 = vshrl.u32 %v1035, 7
        %v1037 = vsub.s32 %v516, %v1036
        %v1038 = vrot.slane %v1034, %v1037
        %v1039 = vsel %vm521, %v1038, %v1038
        %v1040 = vsel %vm523, %v1038, %v1039
        %v1041 = vsel %vm525, %v1038, %v1040
        %v1042 = vsel %vm527, %v1038, %v1041
        %v1043 = vsel %vm529, %v1038, %v1042
        %v1044 = vsel %vm531, %v1038, %v1043
        %v1047 = vadd.f32 %v1017, %v1044
        %v1048 = vadd.f32 %v1018, %v1044
        %v1049 = vadd.f32 %v1019, %v1044
        %v1050 = vadd.f32 %v1020, %v1044
        %v1051 = vadd.f32 %v1021, %v1040
        %v1052 = vsel %vm540, %v1047, -inf
        %1053 = vmax.xlane.f32.xlu0 %v1052
        %v1054 = vpop.xlane.xlu0 %1053
        %v1055 = vsel %vm540, %v1048, -inf
        %1056 = vmax.xlane.f32.xlu0 %v1055
        %v1057 = vpop.xlane.xlu0 %1056
        %v1058 = vsel %vm540, %v1049, -inf
        %1059 = vmax.xlane.f32.xlu0 %v1058
        %v1060 = vpop.xlane.xlu0 %1059
        %v1061 = vsel %vm540, %v1050, -inf
        %1062 = vmax.xlane.f32.xlu0 %v1061
        %v1063 = vpop.xlane.xlu0 %1062
        %v1064 = vsel %vm553, %v1051, -inf
        %1065 = vmax.xlane.f32.xlu0 %v1064
        %v1066 = vpop.xlane.xlu0 %1065
        %v1067 = vsub.f32 %v1047, %v1054
        %v1068 = vsub.f32 %v1048, %v1057
        %v1069 = vsub.f32 %v1049, %v1060
        %v1070 = vsub.f32 %v1050, %v1063
        %v1071 = vsub.f32 %v1051, %v1066
        %v1072 = vmul.f32 %v1067, 1.442695
        %v1073 = vpow.pop %v1072
        %v1074 = vmul.f32 %v1068, 1.442695
        %v1075 = vpow.pop %v1074
        %v1076 = vmul.f32 %v1069, 1.442695
        %v1077 = vpow.pop %v1076
        %v1078 = vmul.f32 %v1070, 1.442695
        %v1079 = vpow.pop %v1078
        %v1080 = vmul.f32 %v1071, 1.442695
        %v1081 = vpow.pop %v1080
        %v1082 = vsel %vm540, %v1073, 0.0
        %1083 = vadd.xlane.f32.xlu0 %v1082
        %v1084 = vpop.xlane.xlu0 %1083
        %v1085 = vsel %vm540, %v1075, 0.0
        %1086 = vadd.xlane.f32.xlu0 %v1085
        %v1087 = vpop.xlane.xlu0 %1086
        %v1088 = vsel %vm540, %v1077, 0.0
        %1089 = vadd.xlane.f32.xlu0 %v1088
        %v1090 = vpop.xlane.xlu0 %1089
        %v1091 = vsel %vm540, %v1079, 0.0
        %1092 = vadd.xlane.f32.xlu0 %v1091
        %v1093 = vpop.xlane.xlu0 %1092
        %v1094 = vsel %vm553, %v1081, 0.0
        %1095 = vadd.xlane.f32.xlu0 %v1094
        %v1096 = vpop.xlane.xlu0 %1095
        %v1097 = vrcp.pop %v1084
        %v1098 = vmul.f32 %v1073, %v1097
        %v1099 = vrcp.pop %v1087
        %v1100 = vmul.f32 %v1075, %v1099
        %v1101 = vrcp.pop %v1090
        %v1102 = vmul.f32 %v1077, %v1101
        %v1103 = vrcp.pop %v1093
        %v1104 = vmul.f32 %v1079, %v1103
        %v1105 = vrcp.pop %v1096
        %v1106 = vmul.f32 %v1081, %v1105
        %v1107 = vsel %vm540, %v1098, 0.0
        %v1108 = vsel %vm540, %v1100, 0.0
        %v1109 = vadd.f32 %v1107, %v1108
        %v1110 = vsel %vm540, %v1102, 0.0
        %v1111 = vadd.f32 %v1109, %v1110
        %v1112 = vsel %vm540, %v1104, 0.0
        %v1113 = vadd.f32 %v1111, %v1112
        %v1114 = vsel %vm553, %v1106, 0.0
        %v1115 = vadd.f32 %v1113, %v1114
        %v1116 = vrot.slane %v1115, 4
        %v1117 = vadd.f32 %v1115, %v1116
        %v1118 = vrot.slane %v1117, 2
        %v1119 = vadd.f32 %v1117, %v1118
        %v1120 = vrot.slane %v1119, 1
        %v1121 = vadd.f32 %v1119, %v1120
        %v1122 = vmul.f32 %v1121, 0.027777778
        %v1123 = vadd.f32 %v1121, 1e-08
        %v1124 = vrcp.pop %v1123
        %v1125 = vmul.f32 1.0, %v1124
        %1127 = vbcast.lane.b32.xlu0 %v1125, 256
        %v1128 = vpop.permute.xlu0 %1127
        %1129 = vxpose.xlu0.b32.start [1/16] %v1098, 128
        %1130 = vxpose.xlu0.b32.cont [2/16] %v1100, 128
        %1131 = vxpose.xlu0.b32.cont [3/16] %v1102, 128
        %1132 = vxpose.xlu0.b32.cont [4/16] %v1104, 128
        %1133 = vxpose.xlu0.b32.cont [5/16] %v1106, 128
        %1134 = vxpose.xlu0.b32.cont [6/16] 0.0, 128
        %1135 = vxpose.xlu0.b32.cont [7/16] 0.0, 128
        %1136 = vxpose.xlu0.b32.cont [8/16] 0.0, 128
        %1137 = vxpose.xlu0.b32.cont [9/16] 0.0, 128
        %1138 = vxpose.xlu0.b32.cont [10/16] 0.0, 128
        %1139 = vxpose.xlu0.b32.cont [11/16] 0.0, 128
        %1140 = vxpose.xlu0.b32.cont [12/16] 0.0, 128
        %1141 = vxpose.xlu0.b32.cont [13/16] 0.0, 128
        %1142 = vxpose.xlu0.b32.cont [14/16] 0.0, 128
        %1143 = vxpose.xlu0.b32.cont [15/16] 0.0, 128
        %1144 = vxpose.xlu0.b32.end [16/16] 0.0, 128
        %v1145 = vpop.trf.xlu0
        %v1146 = vpop.trf.xlu0
        %v1147 = vpop.trf.xlu0
        %v1148 = vpop.trf.xlu0
        %v1149 = vpop.trf.xlu0
        %v1150 = vpop.trf.xlu0
        %v1151 = vpop.trf.xlu0
        %v1152 = vpop.trf.xlu0
        %v1153 = vpop.trf.xlu0
        %v1154 = vpop.trf.xlu0
        %v1155 = vpop.trf.xlu0
        %v1156 = vpop.trf.xlu0
        %v1157 = vpop.trf.xlu0
        %v1158 = vpop.trf.xlu0
        %v1159 = vpop.trf.xlu0
        %v1160 = vpop.trf.xlu0
        %v1162 = vsel %vm651, %v1145, 0
        %1164 = vmatprep.subr.mxu0 0.0
        %1165 = vmatpush1.msra.mxu0 0.0
        %1166 = vmatprep.subr.mxu0 0.0
        %1167 = vmatpush1.msra.mxu0 0.0
        %1168 = vmatprep.subr.mxu0 0.0
        %1169 = vmatpush1.msra.mxu0 0.0
        %1170 = vmatprep.subr.mxu0 0.0
        %1171 = vmatpush1.msra.mxu0 0.0
        %1172 = vmatprep.subr.mxu0 0.0
        %1173 = vmatpush1.msra.mxu0 0.0
        %1174 = vmatprep.subr.mxu0 0.0
        %1175 = vmatpush1.msra.mxu0 0.0
        %1176 = vmatprep.subr.mxu0 0.0
        %1177 = vmatpush1.msra.mxu0 0.0
        %1178 = vmatprep.subr.mxu0 0.0
        %1179 = vmatpush1.msra.mxu0 0.0
        %1180 = vmatprep.subr.mxu0 0.0
        %1181 = vmatpush1.msra.mxu0 0.0
        %1182 = vmatprep.subr.mxu0 0.0
        %1183 = vmatpush1.msra.mxu0 0.0
        %1184 = vmatprep.subr.mxu0 0.0
        %1185 = vmatpush1.msra.mxu0 0.0
        %1186 = vmatprep.subr.mxu0 0.0
        %1187 = vmatpush1.msra.mxu0 %v656
        %1188 = vmatprep.subr.mxu0 0.0
        %1189 = vmatpush1.msra.mxu0 %v243
        %1190 = vmatprep.subr.mxu0 0.0
        %1191 = vmatpush1.msra.mxu0 %v242
        %1192 = vmatprep.subr.mxu0 0.0
        %1193 = vmatpush1.msra.mxu0 %v241
        %1194 = vmatprep.subr.mxu0 0.0
        %1195 = vmatpush1.msra.mxu0 %v240
        %1196 = vmatprep.subr.mxu0 0.0
        %1197 = vmatpush2.msra.mxu0 0.0
        %1198 = vmatprep.subr.mxu0 0.0
        %1199 = vmatpush2.msra.mxu0 0.0
        %1200 = vmatprep.subr.mxu0 0.0
        %1201 = vmatpush2.msra.mxu0 0.0
        %1202 = vmatprep.subr.mxu0 0.0
        %1203 = vmatpush2.msra.mxu0 0.0
        %1204 = vmatprep.subr.mxu0 0.0
        %1205 = vmatpush2.msra.mxu0 0.0
        %1206 = vmatprep.subr.mxu0 0.0
        %1207 = vmatpush2.msra.mxu0 0.0
        %1208 = vmatprep.subr.mxu0 0.0
        %1209 = vmatpush2.msra.mxu0 0.0
        %1210 = vmatprep.subr.mxu0 0.0
        %1211 = vmatpush2.msra.mxu0 0.0
        %1212 = vmatprep.subr.mxu0 0.0
        %1213 = vmatpush2.msra.mxu0 0.0
        %1214 = vmatprep.subr.mxu0 0.0
        %1215 = vmatpush2.msra.mxu0 0.0
        %1216 = vmatprep.subr.mxu0 0.0
        %1217 = vmatpush2.msra.mxu0 0.0
        %1218 = vmatprep.subr.mxu0 0.0
        %1219 = vmatpush2.msra.mxu0 0.0
        %1220 = vmatprep.subr.mxu0 0.0
        %1221 = vmatpush2.msra.mxu0 0.0
        %1222 = vmatprep.subr.mxu0 0.0
        %1223 = vmatpush2.msra.mxu0 0.0
        %1224 = vmatprep.subr.mxu0 0.0
        %1225 = vmatpush2.msra.mxu0 0.0
        %1226 = vmatprep.subr.mxu0 0.0
        %1227 = vmatpush2.msra.mxu0 0.0
        %1228 = vmatprep.mubr.f32.mxu0 0.0
        %1229 = vmatmul.mubr.f32.gmra.mxu0 %v1162
        %v1230 = vpop.f32.mrf.mxu0
        %v1231 = vadd.f32 0.0, %v1230
        %v1232 = vpop.f32.mrf.mxu0
        %1233 = vdwg.mxu0
        %1234 = vmatprep.subr.mxu0 0.0
        %1235 = vmatpush1.msra.mxu0 0.0
        %1236 = vmatprep.subr.mxu0 0.0
        %1237 = vmatpush1.msra.mxu0 0.0
        %1238 = vmatprep.subr.mxu0 0.0
        %1239 = vmatpush1.msra.mxu0 0.0
        %1240 = vmatprep.subr.mxu0 0.0
        %1241 = vmatpush1.msra.mxu0 0.0
        %1242 = vmatprep.subr.mxu0 0.0
        %1243 = vmatpush1.msra.mxu0 0.0
        %1244 = vmatprep.subr.mxu0 0.0
        %1245 = vmatpush1.msra.mxu0 0.0
        %1246 = vmatprep.subr.mxu0 0.0
        %1247 = vmatpush1.msra.mxu0 0.0
        %1248 = vmatprep.subr.mxu0 0.0
        %1249 = vmatpush1.msra.mxu0 0.0
        %1250 = vmatprep.subr.mxu0 0.0
        %1251 = vmatpush1.msra.mxu0 0.0
        %1252 = vmatprep.subr.mxu0 0.0
        %1253 = vmatpush1.msra.mxu0 0.0
        %1254 = vmatprep.subr.mxu0 0.0
        %1255 = vmatpush1.msra.mxu0 0.0
        %1256 = vmatprep.subr.mxu0 0.0
        %1257 = vmatpush1.msra.mxu0 %v728
        %1258 = vmatprep.subr.mxu0 0.0
        %1259 = vmatpush1.msra.mxu0 %v248
        %1260 = vmatprep.subr.mxu0 0.0
        %1261 = vmatpush1.msra.mxu0 %v247
        %1262 = vmatprep.subr.mxu0 0.0
        %1263 = vmatpush1.msra.mxu0 %v246
        %1264 = vmatprep.subr.mxu0 0.0
        %1265 = vmatpush1.msra.mxu0 %v245
        %1266 = vmatprep.subr.mxu0 0.0
        %1267 = vmatpush2.msra.mxu0 0.0
        %1268 = vmatprep.subr.mxu0 0.0
        %1269 = vmatpush2.msra.mxu0 0.0
        %1270 = vmatprep.subr.mxu0 0.0
        %1271 = vmatpush2.msra.mxu0 0.0
        %1272 = vmatprep.subr.mxu0 0.0
        %1273 = vmatpush2.msra.mxu0 0.0
        %1274 = vmatprep.subr.mxu0 0.0
        %1275 = vmatpush2.msra.mxu0 0.0
        %1276 = vmatprep.subr.mxu0 0.0
        %1277 = vmatpush2.msra.mxu0 0.0
        %1278 = vmatprep.subr.mxu0 0.0
        %1279 = vmatpush2.msra.mxu0 0.0
        %1280 = vmatprep.subr.mxu0 0.0
        %1281 = vmatpush2.msra.mxu0 0.0
        %1282 = vmatprep.subr.mxu0 0.0
        %1283 = vmatpush2.msra.mxu0 0.0
        %1284 = vmatprep.subr.mxu0 0.0
        %1285 = vmatpush2.msra.mxu0 0.0
        %1286 = vmatprep.subr.mxu0 0.0
        %1287 = vmatpush2.msra.mxu0 0.0
        %1288 = vmatprep.subr.mxu0 0.0
        %1289 = vmatpush2.msra.mxu0 0.0
        %1290 = vmatprep.subr.mxu0 0.0
        %1291 = vmatpush2.msra.mxu0 0.0
        %1292 = vmatprep.subr.mxu0 0.0
        %1293 = vmatpush2.msra.mxu0 0.0
        %1294 = vmatprep.subr.mxu0 0.0
        %1295 = vmatpush2.msra.mxu0 0.0
        %1296 = vmatprep.subr.mxu0 0.0
        %1297 = vmatpush2.msra.mxu0 0.0
        %1298 = vmatprep.mubr.f32.mxu0 0.0
        %1299 = vmatmul.mubr.f32.gmra.mxu0 %v1162
        %v1300 = vpop.f32.mrf.mxu0
        %v1301 = vadd.f32 0.0, %v1300
        %v1302 = vpop.f32.mrf.mxu0
        %1303 = vdwg.mxu0
        %v1304 = vmul.f32 %v1231, %v1128
        %v1305 = vmul.f32 %v1301, %v1128
        %v1306 = vmul.f32 %v1304, %v1304
        %1308 = vbcast.lane.b32.xlu0 %v1121, 256
        %v1309 = vpop.permute.xlu0 %1308
        %v1310 = vmul.f32 %v1309, %v1128
        %v1311 = vsub.f32 2.0, %v1310
        %v1312 = vmul.f32 %v1306, %v1311
        %v1313 = vsub.f32 %v1305, %v1312
        %v1314 = vmax.f32 %v1313, 0.0
        %v1315 = vadd.f32 %v1314, 1e-08
        %v1316 = vrcp.pop %v1315
        %v1317 = vmul.f32 1.0, %v1316
        %v1318 = vmul.f32 %v1304, %v1317
        %v1319 = vmul.f32 %v1314, 6.2831855
        %v1320 = vadd.f32 %v1319, 1e-08
        %v1321 = vlog2.pop %v1320
        %v1322 = vmul.f32 %v1321, 0.6931472
        %v1323 = vmul.f32 %v1322, -0.5
        %v1324 = vmul.f32 %v1304, 0.5
        %v1325 = vmul.f32 %v1324, %v1318
        %v1326 = vsub.f32 %v1323, %v1325
        %v1327 = vsel %vm267, %v1326, 0.0
        %1328 = vadd.xlane.f32.xlu0 %v1327
        %v1329 = vpop.xlane.xlu0 %1328
        %v1331 = vsel %vm271, %v1318, 0
        %1333 = vmatprep.subr.mxu0 0.0
        %1334 = vmatpush1.xpose.msra.mxu0 0.0
        %1335 = vmatprep.subr.mxu0 0.0
        %1336 = vmatpush1.xpose.msra.mxu0 0.0
        %1337 = vmatprep.subr.mxu0 0.0
        %1338 = vmatpush1.xpose.msra.mxu0 0.0
        %1339 = vmatprep.subr.mxu0 0.0
        %1340 = vmatpush1.xpose.msra.mxu0 0.0
        %1341 = vmatprep.subr.mxu0 0.0
        %1342 = vmatpush1.xpose.msra.mxu0 0.0
        %1343 = vmatprep.subr.mxu0 0.0
        %1344 = vmatpush1.xpose.msra.mxu0 0.0
        %1345 = vmatprep.subr.mxu0 0.0
        %1346 = vmatpush1.xpose.msra.mxu0 0.0
        %1347 = vmatprep.subr.mxu0 0.0
        %1348 = vmatpush1.xpose.msra.mxu0 0.0
        %1349 = vmatprep.subr.mxu0 0.0
        %1350 = vmatpush1.xpose.msra.mxu0 0.0
        %1351 = vmatprep.subr.mxu0 0.0
        %1352 = vmatpush1.xpose.msra.mxu0 0.0
        %1353 = vmatprep.subr.mxu0 0.0
        %1354 = vmatpush1.xpose.msra.mxu0 0.0
        %1355 = vmatprep.subr.mxu0 0.0
        %1356 = vmatpush1.xpose.msra.mxu0 0.0
        %1357 = vmatprep.subr.mxu0 0.0
        %1358 = vmatpush1.xpose.msra.mxu0 0.0
        %1359 = vmatprep.subr.mxu0 0.0
        %1360 = vmatpush1.xpose.msra.mxu0 0.0
        %1361 = vmatprep.subr.mxu0 0.0
        %1362 = vmatpush1.xpose.msra.mxu0 0.0
        %1363 = vmatprep.subr.mxu0 0.0
        %1364 = vmatpush1.xpose.msra.mxu0 %v1331
        %1365 = vmatprep.subr.mxu0 0.0
        %1366 = vmatpush2.xpose.msra.mxu0 0.0
        %1367 = vmatprep.subr.mxu0 0.0
        %1368 = vmatpush2.xpose.msra.mxu0 0.0
        %1369 = vmatprep.subr.mxu0 0.0
        %1370 = vmatpush2.xpose.msra.mxu0 0.0
        %1371 = vmatprep.subr.mxu0 0.0
        %1372 = vmatpush2.xpose.msra.mxu0 0.0
        %1373 = vmatprep.subr.mxu0 0.0
        %1374 = vmatpush2.xpose.msra.mxu0 0.0
        %1375 = vmatprep.subr.mxu0 0.0
        %1376 = vmatpush2.xpose.msra.mxu0 0.0
        %1377 = vmatprep.subr.mxu0 0.0
        %1378 = vmatpush2.xpose.msra.mxu0 0.0
        %1379 = vmatprep.subr.mxu0 0.0
        %1380 = vmatpush2.xpose.msra.mxu0 0.0
        %1381 = vmatprep.subr.mxu0 0.0
        %1382 = vmatpush2.xpose.msra.mxu0 0.0
        %1383 = vmatprep.subr.mxu0 0.0
        %1384 = vmatpush2.xpose.msra.mxu0 0.0
        %1385 = vmatprep.subr.mxu0 0.0
        %1386 = vmatpush2.xpose.msra.mxu0 0.0
        %1387 = vmatprep.subr.mxu0 0.0
        %1388 = vmatpush2.xpose.msra.mxu0 0.0
        %1389 = vmatprep.subr.mxu0 0.0
        %1390 = vmatpush2.xpose.msra.mxu0 0.0
        %1391 = vmatprep.subr.mxu0 0.0
        %1392 = vmatpush2.xpose.msra.mxu0 0.0
        %1393 = vmatprep.subr.mxu0 0.0
        %1394 = vmatpush2.xpose.msra.mxu0 0.0
        %1395 = vmatprep.subr.mxu0 0.0
        %1396 = vmatpush2.xpose.msra.mxu0 0.0
        %1397 = vmatprep.mubr.f32.mxu0 0.0
        %1398 = vmatmul.mubr.f32.gmra.mxu0 %v273
        %v1399 = vpop.f32.mrf.mxu0
        %v1400 = vadd.f32 0.0, %v1399
        %v1401 = vpop.f32.mrf.mxu0
        %1402 = vmatprep.mubr.f32.mxu0 0.0
        %1403 = vmatmul.mubr.f32.gmra.mxu0 %v276
        %v1404 = vpop.f32.mrf.mxu0
        %v1405 = vadd.f32 0.0, %v1404
        %v1406 = vpop.f32.mrf.mxu0
        %1407 = vmatprep.mubr.f32.mxu0 0.0
        %1408 = vmatmul.mubr.f32.gmra.mxu0 %v279
        %v1409 = vpop.f32.mrf.mxu0
        %v1410 = vadd.f32 0.0, %v1409
        %v1411 = vpop.f32.mrf.mxu0
        %1412 = vmatprep.mubr.f32.mxu0 0.0
        %1413 = vmatmul.mubr.f32.gmra.mxu0 %v282
        %v1414 = vpop.f32.mrf.mxu0
        %v1415 = vadd.f32 0.0, %v1414
        %v1416 = vpop.f32.mrf.mxu0
        %1417 = vmatprep.mubr.f32.mxu0 0.0
        %1418 = vmatmul.mubr.f32.gmra.mxu0 %v285
        %v1419 = vpop.f32.mrf.mxu0
        %v1420 = vadd.f32 0.0, %v1419
        %v1421 = vpop.f32.mrf.mxu0
        %1422 = vdwg.mxu0
        %v1424 = vsel %vm271, %v1317, 0
        %1426 = vmatprep.subr.mxu0 0.0
        %1427 = vmatpush1.xpose.msra.mxu0 0.0
        %1428 = vmatprep.subr.mxu0 0.0
        %1429 = vmatpush1.xpose.msra.mxu0 0.0
        %1430 = vmatprep.subr.mxu0 0.0
        %1431 = vmatpush1.xpose.msra.mxu0 0.0
        %1432 = vmatprep.subr.mxu0 0.0
        %1433 = vmatpush1.xpose.msra.mxu0 0.0
        %1434 = vmatprep.subr.mxu0 0.0
        %1435 = vmatpush1.xpose.msra.mxu0 0.0
        %1436 = vmatprep.subr.mxu0 0.0
        %1437 = vmatpush1.xpose.msra.mxu0 0.0
        %1438 = vmatprep.subr.mxu0 0.0
        %1439 = vmatpush1.xpose.msra.mxu0 0.0
        %1440 = vmatprep.subr.mxu0 0.0
        %1441 = vmatpush1.xpose.msra.mxu0 0.0
        %1442 = vmatprep.subr.mxu0 0.0
        %1443 = vmatpush1.xpose.msra.mxu0 0.0
        %1444 = vmatprep.subr.mxu0 0.0
        %1445 = vmatpush1.xpose.msra.mxu0 0.0
        %1446 = vmatprep.subr.mxu0 0.0
        %1447 = vmatpush1.xpose.msra.mxu0 0.0
        %1448 = vmatprep.subr.mxu0 0.0
        %1449 = vmatpush1.xpose.msra.mxu0 0.0
        %1450 = vmatprep.subr.mxu0 0.0
        %1451 = vmatpush1.xpose.msra.mxu0 0.0
        %1452 = vmatprep.subr.mxu0 0.0
        %1453 = vmatpush1.xpose.msra.mxu0 0.0
        %1454 = vmatprep.subr.mxu0 0.0
        %1455 = vmatpush1.xpose.msra.mxu0 0.0
        %1456 = vmatprep.subr.mxu0 0.0
        %1457 = vmatpush1.xpose.msra.mxu0 %v1424
        %1458 = vmatprep.subr.mxu0 0.0
        %1459 = vmatpush2.xpose.msra.mxu0 0.0
        %1460 = vmatprep.subr.mxu0 0.0
        %1461 = vmatpush2.xpose.msra.mxu0 0.0
        %1462 = vmatprep.subr.mxu0 0.0
        %1463 = vmatpush2.xpose.msra.mxu0 0.0
        %1464 = vmatprep.subr.mxu0 0.0
        %1465 = vmatpush2.xpose.msra.mxu0 0.0
        %1466 = vmatprep.subr.mxu0 0.0
        %1467 = vmatpush2.xpose.msra.mxu0 0.0
        %1468 = vmatprep.subr.mxu0 0.0
        %1469 = vmatpush2.xpose.msra.mxu0 0.0
        %1470 = vmatprep.subr.mxu0 0.0
        %1471 = vmatpush2.xpose.msra.mxu0 0.0
        %1472 = vmatprep.subr.mxu0 0.0
        %1473 = vmatpush2.xpose.msra.mxu0 0.0
        %1474 = vmatprep.subr.mxu0 0.0
        %1475 = vmatpush2.xpose.msra.mxu0 0.0
        %1476 = vmatprep.subr.mxu0 0.0
        %1477 = vmatpush2.xpose.msra.mxu0 0.0
        %1478 = vmatprep.subr.mxu0 0.0
        %1479 = vmatpush2.xpose.msra.mxu0 0.0
        %1480 = vmatprep.subr.mxu0 0.0
        %1481 = vmatpush2.xpose.msra.mxu0 0.0
        %1482 = vmatprep.subr.mxu0 0.0
        %1483 = vmatpush2.xpose.msra.mxu0 0.0
        %1484 = vmatprep.subr.mxu0 0.0
        %1485 = vmatpush2.xpose.msra.mxu0 0.0
        %1486 = vmatprep.subr.mxu0 0.0
        %1487 = vmatpush2.xpose.msra.mxu0 0.0
        %1488 = vmatprep.subr.mxu0 0.0
        %1489 = vmatpush2.xpose.msra.mxu0 0.0
        %1490 = vmatprep.mubr.f32.mxu0 0.0
        %1491 = vmatmul.mubr.f32.gmra.mxu0 %v381
        %v1492 = vpop.f32.mrf.mxu0
        %v1493 = vadd.f32 0.0, %v1492
        %v1494 = vpop.f32.mrf.mxu0
        %1495 = vmatprep.mubr.f32.mxu0 0.0
        %1496 = vmatmul.mubr.f32.gmra.mxu0 %v384
        %v1497 = vpop.f32.mrf.mxu0
        %v1498 = vadd.f32 0.0, %v1497
        %v1499 = vpop.f32.mrf.mxu0
        %1500 = vmatprep.mubr.f32.mxu0 0.0
        %1501 = vmatmul.mubr.f32.gmra.mxu0 %v387
        %v1502 = vpop.f32.mrf.mxu0
        %v1503 = vadd.f32 0.0, %v1502
        %v1504 = vpop.f32.mrf.mxu0
        %1505 = vmatprep.mubr.f32.mxu0 0.0
        %1506 = vmatmul.mubr.f32.gmra.mxu0 %v390
        %v1507 = vpop.f32.mrf.mxu0
        %v1508 = vadd.f32 0.0, %v1507
        %v1509 = vpop.f32.mrf.mxu0
        %1510 = vmatprep.mubr.f32.mxu0 0.0
        %1511 = vmatmul.mubr.f32.gmra.mxu0 %v393
        %v1512 = vpop.f32.mrf.mxu0
        %v1513 = vadd.f32 0.0, %v1512
        %v1514 = vpop.f32.mrf.mxu0
        %1515 = vdwg.mxu0
        %v1516 = vmul.f32 %v1493, 0.5
        %v1517 = vmul.f32 %v1498, 0.5
        %v1518 = vmul.f32 %v1503, 0.5
        %v1519 = vmul.f32 %v1508, 0.5
        %v1520 = vmul.f32 %v1513, 0.5
        %v1521 = vsub.f32 %v1400, %v1516
        %v1522 = vsub.f32 %v1405, %v1517
        %v1523 = vsub.f32 %v1410, %v1518
        %v1524 = vsub.f32 %v1415, %v1519
        %v1525 = vsub.f32 %v1420, %v1520
        %v1526 = vadd.f32 %v1122, 1e-08
        %v1527 = vlog2.pop %v1526
        %v1528 = vmul.f32 %v1527, 0.6931472
        %1531 = vbcast.lane.b32.xlu0 %v1528, 256
        %v1532 = vpop.permute.xlu0 %1531
        %v1534 = vadd.f32 %v1329, %v1532
        %1536 = vset.pattern.permute.xlu0 0
        %1537 = vperm.xlu0 %1536, %v1534
        %v1538 = vpop.permute.xlu0 %1537
        %v1539 = vlaneseq
        %v1540 = vshrl.u32 %v1539, 7
        %v1541 = vsub.s32 %v516, %v1540
        %v1542 = vrot.slane %v1538, %v1541
        %v1543 = vsel %vm521, %v1542, %v1542
        %v1544 = vsel %vm523, %v1542, %v1543
        %v1545 = vsel %vm525, %v1542, %v1544
        %v1546 = vsel %vm527, %v1542, %v1545
        %v1547 = vsel %vm529, %v1542, %v1546
        %v1548 = vsel %vm531, %v1542, %v1547
        %v1551 = vadd.f32 %v1521, %v1548
        %v1552 = vadd.f32 %v1522, %v1548
        %v1553 = vadd.f32 %v1523, %v1548
        %v1554 = vadd.f32 %v1524, %v1548
        %v1555 = vadd.f32 %v1525, %v1544
        %v1556 = vsel %vm540, %v1551, -inf
        %1557 = vmax.xlane.f32.xlu0 %v1556
        %v1558 = vpop.xlane.xlu0 %1557
        %v1559 = vsel %vm540, %v1552, -inf
        %1560 = vmax.xlane.f32.xlu0 %v1559
        %v1561 = vpop.xlane.xlu0 %1560
        %v1562 = vsel %vm540, %v1553, -inf
        %1563 = vmax.xlane.f32.xlu0 %v1562
        %v1564 = vpop.xlane.xlu0 %1563
        %v1565 = vsel %vm540, %v1554, -inf
        %1566 = vmax.xlane.f32.xlu0 %v1565
        %v1567 = vpop.xlane.xlu0 %1566
        %v1568 = vsel %vm553, %v1555, -inf
        %1569 = vmax.xlane.f32.xlu0 %v1568
        %v1570 = vpop.xlane.xlu0 %1569
        %v1571 = vsub.f32 %v1551, %v1558
        %v1572 = vsub.f32 %v1552, %v1561
        %v1573 = vsub.f32 %v1553, %v1564
        %v1574 = vsub.f32 %v1554, %v1567
        %v1575 = vsub.f32 %v1555, %v1570
        %v1576 = vmul.f32 %v1571, 1.442695
        %v1577 = vpow.pop %v1576
        %v1578 = vmul.f32 %v1572, 1.442695
        %v1579 = vpow.pop %v1578
        %v1580 = vmul.f32 %v1573, 1.442695
        %v1581 = vpow.pop %v1580
        %v1582 = vmul.f32 %v1574, 1.442695
        %v1583 = vpow.pop %v1582
        %v1584 = vmul.f32 %v1575, 1.442695
        %v1585 = vpow.pop %v1584
        %v1586 = vsel %vm540, %v1577, 0.0
        %1587 = vadd.xlane.f32.xlu0 %v1586
        %v1588 = vpop.xlane.xlu0 %1587
        %v1589 = vsel %vm540, %v1579, 0.0
        %1590 = vadd.xlane.f32.xlu0 %v1589
        %v1591 = vpop.xlane.xlu0 %1590
        %v1592 = vsel %vm540, %v1581, 0.0
        %1593 = vadd.xlane.f32.xlu0 %v1592
        %v1594 = vpop.xlane.xlu0 %1593
        %v1595 = vsel %vm540, %v1583, 0.0
        %1596 = vadd.xlane.f32.xlu0 %v1595
        %v1597 = vpop.xlane.xlu0 %1596
        %v1598 = vsel %vm553, %v1585, 0.0
        %1599 = vadd.xlane.f32.xlu0 %v1598
        %v1600 = vpop.xlane.xlu0 %1599
        %v1601 = vrcp.pop %v1588
        %v1602 = vmul.f32 %v1577, %v1601
        %v1603 = vrcp.pop %v1591
        %v1604 = vmul.f32 %v1579, %v1603
        %v1605 = vrcp.pop %v1594
        %v1606 = vmul.f32 %v1581, %v1605
        %v1607 = vrcp.pop %v1597
        %v1608 = vmul.f32 %v1583, %v1607
        %v1609 = vrcp.pop %v1600
        %v1610 = vmul.f32 %v1585, %v1609
        %v1611 = vsel %vm540, %v1602, 0.0
        %v1612 = vsel %vm540, %v1604, 0.0
        %v1613 = vadd.f32 %v1611, %v1612
        %v1614 = vsel %vm540, %v1606, 0.0
        %v1615 = vadd.f32 %v1613, %v1614
        %v1616 = vsel %vm540, %v1608, 0.0
        %v1617 = vadd.f32 %v1615, %v1616
        %v1618 = vsel %vm553, %v1610, 0.0
        %v1619 = vadd.f32 %v1617, %v1618
        %v1620 = vrot.slane %v1619, 4
        %v1621 = vadd.f32 %v1619, %v1620
        %v1622 = vrot.slane %v1621, 2
        %v1623 = vadd.f32 %v1621, %v1622
        %v1624 = vrot.slane %v1623, 1
        %v1625 = vadd.f32 %v1623, %v1624
        %v1626 = vadd.f32 %v1625, 1e-08
        %v1627 = vrcp.pop %v1626
        %v1628 = vmul.f32 1.0, %v1627
        %1630 = vbcast.lane.b32.xlu0 %v1628, 256
        %v1631 = vpop.permute.xlu0 %1630
        %1632 = vxpose.xlu0.b32.start [1/16] %v1602, 128
        %1633 = vxpose.xlu0.b32.cont [2/16] %v1604, 128
        %1634 = vxpose.xlu0.b32.cont [3/16] %v1606, 128
        %1635 = vxpose.xlu0.b32.cont [4/16] %v1608, 128
        %1636 = vxpose.xlu0.b32.cont [5/16] %v1610, 128
        %1637 = vxpose.xlu0.b32.cont [6/16] 0.0, 128
        %1638 = vxpose.xlu0.b32.cont [7/16] 0.0, 128
        %1639 = vxpose.xlu0.b32.cont [8/16] 0.0, 128
        %1640 = vxpose.xlu0.b32.cont [9/16] 0.0, 128
        %1641 = vxpose.xlu0.b32.cont [10/16] 0.0, 128
        %1642 = vxpose.xlu0.b32.cont [11/16] 0.0, 128
        %1643 = vxpose.xlu0.b32.cont [12/16] 0.0, 128
        %1644 = vxpose.xlu0.b32.cont [13/16] 0.0, 128
        %1645 = vxpose.xlu0.b32.cont [14/16] 0.0, 128
        %1646 = vxpose.xlu0.b32.cont [15/16] 0.0, 128
        %1647 = vxpose.xlu0.b32.end [16/16] 0.0, 128
        %v1648 = vpop.trf.xlu0
        %v1649 = vpop.trf.xlu0
        %v1650 = vpop.trf.xlu0
        %v1651 = vpop.trf.xlu0
        %v1652 = vpop.trf.xlu0
        %v1653 = vpop.trf.xlu0
        %v1654 = vpop.trf.xlu0
        %v1655 = vpop.trf.xlu0
        %v1656 = vpop.trf.xlu0
        %v1657 = vpop.trf.xlu0
        %v1658 = vpop.trf.xlu0
        %v1659 = vpop.trf.xlu0
        %v1660 = vpop.trf.xlu0
        %v1661 = vpop.trf.xlu0
        %v1662 = vpop.trf.xlu0
        %v1663 = vpop.trf.xlu0
        %v1665 = vsel %vm651, %v1648, 0
        %1667 = vmatprep.subr.mxu0 0.0
        %1668 = vmatpush1.msra.mxu0 0.0
        %1669 = vmatprep.subr.mxu0 0.0
        %1670 = vmatpush1.msra.mxu0 0.0
        %1671 = vmatprep.subr.mxu0 0.0
        %1672 = vmatpush1.msra.mxu0 0.0
        %1673 = vmatprep.subr.mxu0 0.0
        %1674 = vmatpush1.msra.mxu0 0.0
        %1675 = vmatprep.subr.mxu0 0.0
        %1676 = vmatpush1.msra.mxu0 0.0
        %1677 = vmatprep.subr.mxu0 0.0
        %1678 = vmatpush1.msra.mxu0 0.0
        %1679 = vmatprep.subr.mxu0 0.0
        %1680 = vmatpush1.msra.mxu0 0.0
        %1681 = vmatprep.subr.mxu0 0.0
        %1682 = vmatpush1.msra.mxu0 0.0
        %1683 = vmatprep.subr.mxu0 0.0
        %1684 = vmatpush1.msra.mxu0 0.0
        %1685 = vmatprep.subr.mxu0 0.0
        %1686 = vmatpush1.msra.mxu0 0.0
        %1687 = vmatprep.subr.mxu0 0.0
        %1688 = vmatpush1.msra.mxu0 0.0
        %1689 = vmatprep.subr.mxu0 0.0
        %1690 = vmatpush1.msra.mxu0 %v656
        %1691 = vmatprep.subr.mxu0 0.0
        %1692 = vmatpush1.msra.mxu0 %v243
        %1693 = vmatprep.subr.mxu0 0.0
        %1694 = vmatpush1.msra.mxu0 %v242
        %1695 = vmatprep.subr.mxu0 0.0
        %1696 = vmatpush1.msra.mxu0 %v241
        %1697 = vmatprep.subr.mxu0 0.0
        %1698 = vmatpush1.msra.mxu0 %v240
        %1699 = vmatprep.subr.mxu0 0.0
        %1700 = vmatpush2.msra.mxu0 0.0
        %1701 = vmatprep.subr.mxu0 0.0
        %1702 = vmatpush2.msra.mxu0 0.0
        %1703 = vmatprep.subr.mxu0 0.0
        %1704 = vmatpush2.msra.mxu0 0.0
        %1705 = vmatprep.subr.mxu0 0.0
        %1706 = vmatpush2.msra.mxu0 0.0
        %1707 = vmatprep.subr.mxu0 0.0
        %1708 = vmatpush2.msra.mxu0 0.0
        %1709 = vmatprep.subr.mxu0 0.0
        %1710 = vmatpush2.msra.mxu0 0.0
        %1711 = vmatprep.subr.mxu0 0.0
        %1712 = vmatpush2.msra.mxu0 0.0
        %1713 = vmatprep.subr.mxu0 0.0
        %1714 = vmatpush2.msra.mxu0 0.0
        %1715 = vmatprep.subr.mxu0 0.0
        %1716 = vmatpush2.msra.mxu0 0.0
        %1717 = vmatprep.subr.mxu0 0.0
        %1718 = vmatpush2.msra.mxu0 0.0
        %1719 = vmatprep.subr.mxu0 0.0
        %1720 = vmatpush2.msra.mxu0 0.0
        %1721 = vmatprep.subr.mxu0 0.0
        %1722 = vmatpush2.msra.mxu0 0.0
        %1723 = vmatprep.subr.mxu0 0.0
        %1724 = vmatpush2.msra.mxu0 0.0
        %1725 = vmatprep.subr.mxu0 0.0
        %1726 = vmatpush2.msra.mxu0 0.0
        %1727 = vmatprep.subr.mxu0 0.0
        %1728 = vmatpush2.msra.mxu0 0.0
        %1729 = vmatprep.subr.mxu0 0.0
        %1730 = vmatpush2.msra.mxu0 0.0
        %1731 = vmatprep.mubr.f32.mxu0 0.0
        %1732 = vmatmul.mubr.f32.gmra.mxu0 %v1665
        %v1733 = vpop.f32.mrf.mxu0
        %v1734 = vadd.f32 0.0, %v1733
        %v1735 = vpop.f32.mrf.mxu0
        %1736 = vdwg.mxu0
        %1737 = vmatprep.subr.mxu0 0.0
        %1738 = vmatpush1.msra.mxu0 0.0
        %1739 = vmatprep.subr.mxu0 0.0
        %1740 = vmatpush1.msra.mxu0 0.0
        %1741 = vmatprep.subr.mxu0 0.0
        %1742 = vmatpush1.msra.mxu0 0.0
        %1743 = vmatprep.subr.mxu0 0.0
        %1744 = vmatpush1.msra.mxu0 0.0
        %1745 = vmatprep.subr.mxu0 0.0
        %1746 = vmatpush1.msra.mxu0 0.0
        %1747 = vmatprep.subr.mxu0 0.0
        %1748 = vmatpush1.msra.mxu0 0.0
        %1749 = vmatprep.subr.mxu0 0.0
        %1750 = vmatpush1.msra.mxu0 0.0
        %1751 = vmatprep.subr.mxu0 0.0
        %1752 = vmatpush1.msra.mxu0 0.0
        %1753 = vmatprep.subr.mxu0 0.0
        %1754 = vmatpush1.msra.mxu0 0.0
        %1755 = vmatprep.subr.mxu0 0.0
        %1756 = vmatpush1.msra.mxu0 0.0
        %1757 = vmatprep.subr.mxu0 0.0
        %1758 = vmatpush1.msra.mxu0 0.0
        %1759 = vmatprep.subr.mxu0 0.0
        %1760 = vmatpush1.msra.mxu0 %v728
        %1761 = vmatprep.subr.mxu0 0.0
        %1762 = vmatpush1.msra.mxu0 %v248
        %1763 = vmatprep.subr.mxu0 0.0
        %1764 = vmatpush1.msra.mxu0 %v247
        %1765 = vmatprep.subr.mxu0 0.0
        %1766 = vmatpush1.msra.mxu0 %v246
        %1767 = vmatprep.subr.mxu0 0.0
        %1768 = vmatpush1.msra.mxu0 %v245
        %1769 = vmatprep.subr.mxu0 0.0
        %1770 = vmatpush2.msra.mxu0 0.0
        %1771 = vmatprep.subr.mxu0 0.0
        %1772 = vmatpush2.msra.mxu0 0.0
        %1773 = vmatprep.subr.mxu0 0.0
        %1774 = vmatpush2.msra.mxu0 0.0
        %1775 = vmatprep.subr.mxu0 0.0
        %1776 = vmatpush2.msra.mxu0 0.0
        %1777 = vmatprep.subr.mxu0 0.0
        %1778 = vmatpush2.msra.mxu0 0.0
        %1779 = vmatprep.subr.mxu0 0.0
        %1780 = vmatpush2.msra.mxu0 0.0
        %1781 = vmatprep.subr.mxu0 0.0
        %1782 = vmatpush2.msra.mxu0 0.0
        %1783 = vmatprep.subr.mxu0 0.0
        %1784 = vmatpush2.msra.mxu0 0.0
        %1785 = vmatprep.subr.mxu0 0.0
        %1786 = vmatpush2.msra.mxu0 0.0
        %1787 = vmatprep.subr.mxu0 0.0
        %1788 = vmatpush2.msra.mxu0 0.0
        %1789 = vmatprep.subr.mxu0 0.0
        %1790 = vmatpush2.msra.mxu0 0.0
        %1791 = vmatprep.subr.mxu0 0.0
        %1792 = vmatpush2.msra.mxu0 0.0
        %1793 = vmatprep.subr.mxu0 0.0
        %1794 = vmatpush2.msra.mxu0 0.0
        %1795 = vmatprep.subr.mxu0 0.0
        %1796 = vmatpush2.msra.mxu0 0.0
        %1797 = vmatprep.subr.mxu0 0.0
        %1798 = vmatpush2.msra.mxu0 0.0
        %1799 = vmatprep.subr.mxu0 0.0
        %1800 = vmatpush2.msra.mxu0 0.0
        %1801 = vmatprep.mubr.f32.mxu0 0.0
        %1802 = vmatmul.mubr.f32.gmra.mxu0 %v1665
        %v1803 = vpop.f32.mrf.mxu0
        %v1804 = vadd.f32 0.0, %v1803
        %v1805 = vpop.f32.mrf.mxu0
        %1806 = vdwg.mxu0
        %v1807 = vmul.f32 %v1734, %v1631
        %v1808 = vmul.f32 %v1804, %v1631
        %v1809 = vmul.f32 %v1807, %v1807
        %1811 = vbcast.lane.b32.xlu0 %v1625, 256
        %v1812 = vpop.permute.xlu0 %1811
        %v1813 = vmul.f32 %v1812, %v1631
        %v1814 = vsub.f32 2.0, %v1813
        %v1815 = vmul.f32 %v1809, %v1814
        %v1816 = vsub.f32 %v1808, %v1815
        %v1817 = vmax.f32 %v1816, 0.0
        %v1818 = vld [vmem:[%s239] sm:$0xf]
        %v1819 = vmul.f32 %v1817, %v1818
        %v1820 = vadd.f32 %v1807, %v1819
        %1821 = vst.msk [vmem:[%s230] sm:$0xf] %vm267, %v1820
        %s1822 = sand.u32 %s142, 1
        %s1823 = scalar_lea.sflag [#allocation3], %s1822
        %s1824 = sand.u32 %s142, 1
        %s1825 = smul.addr %s1824, 4
        %s1826 = scalar_lea.vmem [#allocation2], %s1825
        // Predicated region
        $region41: #{tpu_custom_call.1} parent=39 // pred_check
          %p1827 = pneg %p152
        $region42: #{tpu_custom_call.1} parent=39 // pred_check_branch
          %1829 = sbr.rel (%p1827) target = $region44
        $region43: #{tpu_custom_call.1} parent=39 // pred_region
          %s1831 = ssub.s32 64, 64
          %1832 = vsyncadd %s1823, %s1831
          %s1833 = smul.addr %s19, 64
          %s1834 = scalar_lea.hbm %s5, %s1833
          %s1836 = sshll.u32 %s1826, 4
          %s1837 = int_to_ptr.vmem [resolvable:$true] %s1836
          %1839 = dma.vmem_to_hbm [thread:$0]  %s1837, 64, %s1834, %s1823
        $region44: #{tpu_custom_call.1} parent=39 // pred_fallthru
          _
      $region40: #{tpu_custom_call.1} parent=5 // pred_fallthru
        _
      %p1840 = scmp.le.s32.totalorder 2, %s14
      // Predicated region
      $region45: #{tpu_custom_call.1} parent=5 // pred_check
        %p1841 = pneg %p1840
      $region46: #{tpu_custom_call.1} parent=5 // pred_check_branch
        %1843 = sbr.rel (%p1841) target = $region48
      $region47: #{tpu_custom_call.1} parent=5 // pred_region
        %s1844 = ssub.s32 %s14, 2
        // Predicated region
        $region49: #{tpu_custom_call.1} parent=47 // pred_check
          %p1845 = pneg %p158
        $region50: #{tpu_custom_call.1} parent=47 // pred_check_branch
          %1847 = sbr.rel (%p1845) target = $region52
        $region51: #{tpu_custom_call.1} parent=47 // pred_region
          %s1848 = sand.u32 %s143, 1
          %s1849 = scalar_lea.sflag [#allocation3], %s1848
          %s1850 = sand.u32 %s143, 1
          %s1851 = smul.addr %s1850, 4
          %s1852 = scalar_lea.vmem [#allocation2], %s1851
          %1853 = dma.done %s1849, 64
        $region52: #{tpu_custom_call.1} parent=47 // pred_fallthru
          _
      $region48: #{tpu_custom_call.1} parent=5 // pred_fallthru
        _
    $region6: #{tpu_custom_call.1} parent=1 // loop_footer
      %s18 = sadd.s32 1, %s14
    $region7: #{tpu_custom_call.1} parent=1 // loop_footer_branch
      %13 = sbr.rel target = $region3
    $region8: #{tpu_custom_call.1} parent=1 // loop_exit
      _
    %1854 = vsyncpa [#allocation3], 1
    %s1855 = scalar_lea.sflag [#allocation3], 1
    %1856 = vsyncpa %s1855, 1

</llo_original>
